<compile_context>
chip_gen: v7x
topology: tpu7x:2x2x1
jax: 0.10.0
libtpu: 0.0.40
codegen_flags: <defaults>
</compile_context>

<pallas_src>
import jax
import jax.numpy as jnp
from jax.experimental import pallas as pl
from jax.experimental.pallas import tpu as pltpu

HEADS = 8


def decoder_kernel(l_ref,                      # SMEM scalar prefetch (used by index_maps)
                   a_ref, c_ref, h_ref, cs_ref, e_ref,
                   wih_a_ref, wih_e_ref, whh_ref, bl_ref,
                   maskq_ref, maskv_ref, wp_ref, bp_ref, wout_ref, bout_ref,
                   out_ref, caoa_ref, hout_ref, csout_ref):
    f32, bf16 = jnp.float32, jnp.bfloat16

    a_bf = a_ref[...]                       # (1, N, C) bf16 feature map (k = v)
    a_f32 = a_bf.astype(f32)

    # --- af = spatial mean + context (N=64 -> cheap cross-sublane reduce) ---
    af = jnp.mean(a_f32, axis=1) + c_ref[0]            # (1, C) f32

    # --- embedding row, gathered by the BlockSpec index_map from HBM --------
    e_bf = e_ref[0]                                    # (1, C) bf16

    # --- LSTMCell: concat-free, per-gate weights (no lane slicing) ----------
    af_bf = af.astype(bf16)
    hprev_bf = h_ref[0].astype(bf16)

    def gate(g):                                       # g is a static int
        return (jnp.dot(af_bf, wih_a_ref[g], preferred_element_type=f32)
                + jnp.dot(e_bf, wih_e_ref[g], preferred_element_type=f32)
                + jnp.dot(hprev_bf, whh_ref[g], preferred_element_type=f32)
                + bl_ref[g])                           # (1, C) f32

    i_g = jax.nn.sigmoid(gate(0))
    f_g = jax.nn.sigmoid(gate(1))
    g_g = jnp.tanh(gate(2))
    o_g = jax.nn.sigmoid(gate(3))
    cs_new = f_g * cs_ref[0] + i_g * g_g               # (1, C)
    h_new = o_g * jnp.tanh(cs_new)                     # (1, C)
    hout_ref[0] = h_new
    csout_ref[0] = cs_new

    # --- 8-head attention, heads batched via head-mask matmuls --------------
    # maskq[h, c] = 1/sqrt(dh) if lane c belongs to head h else 0
    q_masked = (h_new[:, None, :] * maskq_ref[...]).astype(bf16)      # (1, H, C)
    s = jnp.einsum('bnc,bhc->bnh', a_bf, q_masked,
                   preferred_element_type=f32)                        # (1, N, H)
    s = s - jnp.max(s, axis=1, keepdims=True)
    p = jnp.exp(s)
    inv_den = pl.reciprocal(jnp.sum(p, axis=1, keepdims=True), approx=True)
    p = p * inv_den                                                   # softmax over N
    # expand per-head probs back to their head's C lanes, then weight `a`
    p_c = jnp.einsum('bnh,bhc->bnc', p.astype(bf16), maskv_ref[...],
                     preferred_element_type=f32)                      # (1, N, C)
    v_attn = jnp.sum(p_c * a_f32, axis=1)                             # (1, C)

    # --- AoA: Linear(2C->2C) + GLU, concat-free and slice-free --------------
    v_bf = v_attn.astype(bf16)
    hnew_bf = h_new.astype(bf16)
    lin_a = (jnp.dot(v_bf, wp_ref[0, 0], preferred_element_type=f32)
             + jnp.dot(hnew_bf, wp_ref[1, 0], preferred_element_type=f32)
             + bp_ref[0])
    lin_b = (jnp.dot(v_bf, wp_ref[0, 1], preferred_element_type=f32)
             + jnp.dot(hnew_bf, wp_ref[1, 1], preferred_element_type=f32)
             + bp_ref[1])
    caoa = lin_a * jax.nn.sigmoid(lin_b)               # (1, C)
    caoa_ref[0] = caoa

    # --- output projection (dropout == identity in eval); V padded to 128k --
    out_ref[0] = (jnp.dot(caoa.astype(bf16), wout_ref[...],
                          preferred_element_type=f32) + bout_ref[...])


def init_params(key, inplanes, output_dim):
    C, V = inplanes, output_dim
    ks = jax.random.split(key, 8)
    s = 0.1
    return {
        'emb':   jax.random.normal(ks[0], (V, C), jnp.float32) * s,
        'w_ih':  jax.random.normal(ks[1], (4 * C, 2 * C), jnp.float32) * s,
        'w_hh':  jax.random.normal(ks[2], (4 * C, C), jnp.float32) * s,
        'b_ih':  jax.random.normal(ks[3], (4 * C,), jnp.float32) * s,
        'b_hh':  jax.random.normal(ks[4], (4 * C,), jnp.float32) * s,
        'w_p':   jax.random.normal(ks[5], (2 * C, 2 * C), jnp.float32) * s,
        'b_p':   jax.random.normal(ks[6], (2 * C,), jnp.float32) * s,
        'w_out': jax.random.normal(ks[7], (V, C), jnp.float32) * s,
        'b_out': jnp.zeros((V,), jnp.float32),
    }


def decoder_forward(a_nchw, l, c, h, cs, params):
    B, C, Hh, Ww = a_nchw.shape
    N = Hh * Ww
    V = params['w_out'].shape[0]
    dh = C // HEADS
    Vp = ((V + 127) // 128) * 128
    f32, bf16 = jnp.float32, jnp.bfloat16

    # --- layout plumbing / weight re-packing (wrapper-side XLA) -------------
    a_bnc = jnp.transpose(a_nchw.reshape(B, C, N), (0, 2, 1)).astype(bf16)
    c3 = c.astype(f32).reshape(B, 1, C)
    h3 = h.astype(f32).reshape(B, 1, C)
    cs3 = cs.astype(f32).reshape(B, 1, C)
    emb3 = params['emb'].astype(bf16).reshape(V, 1, C)

    # per-gate LSTM weights transposed to (in, out); input split into af/e halves
    wih_r = params['w_ih'].reshape(4, C, 2 * C)                        # (4, C_out, 2C_in)
    wih_a = jnp.transpose(wih_r[:, :, :C], (0, 2, 1)).astype(bf16)     # (4, C_in, C_out)
    wih_e = jnp.transpose(wih_r[:, :, C:], (0, 2, 1)).astype(bf16)
    whh_g = jnp.transpose(params['w_hh'].reshape(4, C, C), (0, 2, 1)).astype(bf16)
    b_lstm = (params['b_ih'] + params['b_hh']).reshape(4, 1, C).astype(f32)

    # constant head-membership masks: lane c belongs to head c // dh
    mask = (jnp.arange(C)[None, :] // dh) == jnp.arange(HEADS)[:, None]
    maskq = (mask.astype(f32) / (dh ** 0.5)).reshape(1, HEADS, C)
    maskv = mask.astype(bf16).reshape(1, HEADS, C)

    # AoA Linear(2C->2C) split into 4 (C,C) blocks: [input v|q] x [output value|gate]
    wpT = params['w_p'].T                                              # (2C_in, 2C_out)
    wp_stack = jnp.stack([
        jnp.stack([wpT[:C, :C], wpT[:C, C:]]),
        jnp.stack([wpT[C:, :C], wpT[C:, C:]]),
    ]).astype(bf16)                                                    # (2, 2, C, C)
    bp_stack = params['b_p'].reshape(2, 1, C).astype(f32)

    # lane-dense logits: pad V up to a multiple of 128 with zero weights / bias
    wout_p = jnp.zeros((C, Vp), bf16).at[:, :V].set(params['w_out'].T.astype(bf16))
    bout_p = jnp.zeros((1, Vp), f32).at[:, :V].set(params['b_out'].astype(f32))

    def _full(shape):
        nd = len(shape)
        return pl.BlockSpec(shape, lambda b, l_s, nd=nd: (0,) * nd)

    row_c = pl.BlockSpec((1, 1, C), lambda b, l_s: (b, 0, 0))
    row_v = pl.BlockSpec((1, 1, Vp), lambda b, l_s: (b, 0, 0))
    a_spec = pl.BlockSpec((1, N, C), lambda b, l_s: (b, 0, 0))
    emb_spec = pl.BlockSpec((1, 1, C), lambda b, l_s: (l_s[b], 0, 0))   # gather one row

    grid_spec = pltpu.PrefetchScalarGridSpec(
        num_scalar_prefetch=1,
        grid=(B,),
        in_specs=[a_spec, row_c, row_c, row_c, emb_spec,
                  _full((4, C, C)), _full((4, C, C)), _full((4, C, C)), _full((4, 1, C)),
                  _full((1, HEADS, C)), _full((1, HEADS, C)),
                  _full((2, 2, C, C)), _full((2, 1, C)),
                  _full((C, Vp)), _full((1, Vp))],
        out_specs=(row_v, row_c, row_c, row_c),
    )
    out_shapes = (
        jax.ShapeDtypeStruct((B, 1, Vp), f32),   # logits (lane-dense, padded)
        jax.ShapeDtypeStruct((B, 1, C), f32),    # c (AoA output)
        jax.ShapeDtypeStruct((B, 1, C), f32),    # h_new
        jax.ShapeDtypeStruct((B, 1, C), f32),    # cell_new
    )
    out_p, caoa, h_new, cs_new = pl.pallas_call(
        decoder_kernel,
        out_shape=out_shapes,
        grid_spec=grid_spec,
        compiler_params=pltpu.CompilerParams(
            dimension_semantics=("parallel",)),
    )(l.astype(jnp.int32), a_bnc, c3, h3, cs3, emb3,
      wih_a, wih_e, whh_g, b_lstm, maskq, maskv,
      wp_stack, bp_stack, wout_p, bout_p)

    return (out_p.reshape(B, Vp)[:, :V],
            caoa.reshape(B, C), h_new.reshape(B, C), cs_new.reshape(B, C))


def reference_forward(a_nchw, l, c, h, cs, params):
    """Pure-JAX f32 reference mirroring the PyTorch module (eval mode)."""
    B, C, H, W = a_nchw.shape
    N = H * W
    a_bnc = jnp.transpose(a_nchw.reshape(B, C, N), (0, 2, 1))
    af = jnp.mean(a_nchw, axis=(2, 3)) + c
    e = params['emb'][l]
    x = jnp.concatenate([af, e], axis=-1)
    gates = x @ params['w_ih'].T + params['b_ih'] + h @ params['w_hh'].T + params['b_hh']
    i_g, f_g, g_g, o_g = jnp.split(gates, 4, axis=-1)
    i_g, f_g, o_g = jax.nn.sigmoid(i_g), jax.nn.sigmoid(f_g), jax.nn.sigmoid(o_g)
    g_g = jnp.tanh(g_g)
    cs_n = f_g * cs + i_g * g_g
    h_n = o_g * jnp.tanh(cs_n)
    dh = C // HEADS
    outs = []
    for hd in range(HEADS):
        sl = slice(hd * dh, (hd + 1) * dh)
        qh, kh = h_n[:, None, sl], a_bnc[:, :, sl]
        s = jnp.einsum('bqd,bnd->bqn', qh, kh) / (dh ** 0.5)
        p = jax.nn.softmax(s, axis=-1)
        outs.append(jnp.einsum('bqn,bnd->bqd', p, kh)[:, 0, :])
    v_attn = jnp.concatenate(outs, axis=-1)
    xcat = jnp.concatenate([v_attn, h_n], axis=-1)
    lin = xcat @ params['w_p'].T + params['b_p']
    caoa = lin[:, :C] * jax.nn.sigmoid(lin[:, C:])
    out = caoa @ params['w_out'].T + params['b_out']
    return out, caoa, h_n, cs_n


if __name__ == "__main__":
    key = jax.random.PRNGKey(0)
    B, C, H, W = 2, 32, 8, 8          # inplanes = 32, N = 64
    V = 64                            # output_dim (vocab) = 64
    k_a, k_l, k_c, k_h, k_cs, k_p = jax.random.split(key, 6)

    a = jax.random.normal(k_a, (B, C, H, W), jnp.float32)
    l = jax.random.randint(k_l, (B,), 0, V, dtype=jnp.int32)
    c = jax.random.normal(k_c, (B, C), jnp.float32)
    h = jax.random.normal(k_h, (B, C), jnp.float32)
    cs = jax.random.normal(k_cs, (B, C), jnp.float32)
    params = init_params(k_p, C, V)

    outs = decoder_forward(a, l, c, h, cs, params)
    outs = jax.block_until_ready(outs)

    refs = reference_forward(a, l, c, h, cs, params)
    # Tolerance loosened vs the f32-only version: kernel matmul operands are
    # bf16 (f32 accumulation, approx-reciprocal softmax), reference is pure f32.
    for got, want in zip(outs, refs):
        assert jnp.allclose(got, want, atol=3e-2, rtol=3e-2), "mismatch vs reference"

    print("KERNEL_OK")
</pallas_src>

<mosaic_0001>
module attributes {stable_mosaic.version = 11 : i64} {
  func.func @decoder_kernel(%arg0: i32, %arg1: memref<2xi32, #tpu.memory_space<smem>>, %arg2: memref<1x64x32xbf16, #tpu.memory_space<vmem>>, %arg3: memref<1x1x32xf32, #tpu.memory_space<vmem>>, %arg4: memref<1x1x32xf32, #tpu.memory_space<vmem>>, %arg5: memref<1x1x32xf32, #tpu.memory_space<vmem>>, %arg6: memref<1x1x32xbf16, #tpu.memory_space<vmem>>, %arg7: memref<4x32x32xbf16, #tpu.memory_space<vmem>>, %arg8: memref<4x32x32xbf16, #tpu.memory_space<vmem>>, %arg9: memref<4x32x32xbf16, #tpu.memory_space<vmem>>, %arg10: memref<4x1x32xf32, #tpu.memory_space<vmem>>, %arg11: memref<1x8x32xf32, #tpu.memory_space<vmem>>, %arg12: memref<1x8x32xbf16, #tpu.memory_space<vmem>>, %arg13: memref<2x2x32x32xbf16, #tpu.memory_space<vmem>>, %arg14: memref<2x1x32xf32, #tpu.memory_space<vmem>>, %arg15: memref<32x128xbf16, #tpu.memory_space<vmem>>, %arg16: memref<1x128xf32, #tpu.memory_space<vmem>>, %arg17: memref<1x1x128xf32, #tpu.memory_space<vmem>>, %arg18: memref<1x1x32xf32, #tpu.memory_space<vmem>>, %arg19: memref<1x1x32xf32, #tpu.memory_space<vmem>>, %arg20: memref<1x1x32xf32, #tpu.memory_space<vmem>>) attributes {dimension_semantics = [#tpu.dimension_semantics<parallel>], iteration_bounds = array<i64: 2>, scalar_prefetch = 1 : i64, scratch_operands = 0 : i64, tpu.core_type = #tpu.core_type<tc>, window_params = [{transform_indices = @transform_0, window_bounds = array<i64: 1, 64, 32>}, {transform_indices = @transform_1, window_bounds = array<i64: 1, 1, 32>}, {transform_indices = @transform_2, window_bounds = array<i64: 1, 1, 32>}, {transform_indices = @transform_3, window_bounds = array<i64: 1, 1, 32>}, {transform_indices = @transform_4, window_bounds = array<i64: 1, 1, 32>}, {pipeline_mode = #tpu.pipeline_mode<synchronous>, transform_indices = @transform_5, window_bounds = array<i64: 4, 32, 32>}, {pipeline_mode = #tpu.pipeline_mode<synchronous>, transform_indices = @transform_6, window_bounds = array<i64: 4, 32, 32>}, {pipeline_mode = #tpu.pipeline_mode<synchronous>, transform_indices = @transform_7, window_bounds = array<i64: 4, 32, 32>}, {pipeline_mode = #tpu.pipeline_mode<synchronous>, transform_indices = @transform_8, window_bounds = array<i64: 4, 1, 32>}, {pipeline_mode = #tpu.pipeline_mode<synchronous>, transform_indices = @transform_9, window_bounds = array<i64: 1, 8, 32>}, {pipeline_mode = #tpu.pipeline_mode<synchronous>, transform_indices = @transform_10, window_bounds = array<i64: 1, 8, 32>}, {pipeline_mode = #tpu.pipeline_mode<synchronous>, transform_indices = @transform_11, window_bounds = array<i64: 2, 2, 32, 32>}, {pipeline_mode = #tpu.pipeline_mode<synchronous>, transform_indices = @transform_12, window_bounds = array<i64: 2, 1, 32>}, {pipeline_mode = #tpu.pipeline_mode<synchronous>, transform_indices = @transform_13, window_bounds = array<i64: 32, 128>}, {pipeline_mode = #tpu.pipeline_mode<synchronous>, transform_indices = @transform_14, window_bounds = array<i64: 1, 128>}, {transform_indices = @transform_15, window_bounds = array<i64: 1, 1, 128>}, {transform_indices = @transform_16, window_bounds = array<i64: 1, 1, 32>}, {transform_indices = @transform_17, window_bounds = array<i64: 1, 1, 32>}, {transform_indices = @transform_18, window_bounds = array<i64: 1, 1, 32>}]} {
    %c0 = arith.constant 0 : index
    %c0_0 = arith.constant 0 : index
    %c0_1 = arith.constant 0 : index
    %0 = vector.load %arg2[%c0, %c0_0, %c0_1] : memref<1x64x32xbf16, #tpu.memory_space<vmem>>, vector<1x64x32xbf16>
    %1 = arith.extf %0 : vector<1x64x32xbf16> to vector<1x64x32xf32>
    %cst = arith.constant dense<0.000000e+00> : vector<1x32xf32>
    %2 = vector.multi_reduction <add>, %1, %cst [1] : vector<1x64x32xf32> to vector<1x32xf32>
    %cst_2 = arith.constant 6.400000e+01 : f32
    %3 = vector.broadcast %cst_2 : f32 to vector<1x32xf32>
    %4 = arith.divf %2, %3 : vector<1x32xf32>
    %c0_3 = arith.constant 0 : index
    %c0_4 = arith.constant 0 : index
    %c0_5 = arith.constant 0 : index
    %5 = vector.load %arg3[%c0_3, %c0_4, %c0_5] : memref<1x1x32xf32, #tpu.memory_space<vmem>>, vector<1x1x32xf32>
    %6 = vector.shape_cast %5 : vector<1x1x32xf32> to vector<1x32xf32>
    %7 = arith.addf %4, %6 : vector<1x32xf32>
    %c0_6 = arith.constant 0 : index
    %c0_7 = arith.constant 0 : index
    %c0_8 = arith.constant 0 : index
    %8 = vector.load %arg6[%c0_6, %c0_7, %c0_8] : memref<1x1x32xbf16, #tpu.memory_space<vmem>>, vector<1x1x32xbf16>
    %9 = vector.shape_cast %8 : vector<1x1x32xbf16> to vector<1x32xbf16>
    %10 = arith.truncf %7 : vector<1x32xf32> to vector<1x32xbf16>
    %c0_9 = arith.constant 0 : index
    %c0_10 = arith.constant 0 : index
    %c0_11 = arith.constant 0 : index
    %11 = vector.load %arg4[%c0_9, %c0_10, %c0_11] : memref<1x1x32xf32, #tpu.memory_space<vmem>>, vector<1x1x32xf32>
    %12 = vector.shape_cast %11 : vector<1x1x32xf32> to vector<1x32xf32>
    %13 = arith.truncf %12 : vector<1x32xf32> to vector<1x32xbf16>
    %c0_12 = arith.constant 0 : index
    %c0_13 = arith.constant 0 : index
    %c0_14 = arith.constant 0 : index
    %14 = vector.load %arg7[%c0_12, %c0_13, %c0_14] : memref<4x32x32xbf16, #tpu.memory_space<vmem>>, vector<1x32x32xbf16>
    %15 = vector.shape_cast %14 : vector<1x32x32xbf16> to vector<32x32xbf16>
    %cst_15 = arith.constant dense<0.000000e+00> : vector<1x32xf32>
    %16 = tpu.matmul %10, %15, %cst_15 {dimension_numbers = #tpu.dot_dimension_numbers<[1], [0], [0], [1], [0, 0, 1, 1], [], []>} : vector<1x32xbf16>, vector<32x32xbf16>, vector<1x32xf32> -> vector<1x32xf32>
    %c0_16 = arith.constant 0 : index
    %c0_17 = arith.constant 0 : index
    %c0_18 = arith.constant 0 : index
    %17 = vector.load %arg8[%c0_16, %c0_17, %c0_18] : memref<4x32x32xbf16, #tpu.memory_space<vmem>>, vector<1x32x32xbf16>
    %18 = vector.shape_cast %17 : vector<1x32x32xbf16> to vector<32x32xbf16>
    %cst_19 = arith.constant dense<0.000000e+00> : vector<1x32xf32>
    %19 = tpu.matmul %9, %18, %cst_19 {dimension_numbers = #tpu.dot_dimension_numbers<[1], [0], [0], [1], [0, 0, 1, 1], [], []>} : vector<1x32xbf16>, vector<32x32xbf16>, vector<1x32xf32> -> vector<1x32xf32>
    %20 = arith.addf %16, %19 : vector<1x32xf32>
    %c0_20 = arith.constant 0 : index
    %c0_21 = arith.constant 0 : index
    %c0_22 = arith.constant 0 : index
    %21 = vector.load %arg9[%c0_20, %c0_21, %c0_22] : memref<4x32x32xbf16, #tpu.memory_space<vmem>>, vector<1x32x32xbf16>
    %22 = vector.shape_cast %21 : vector<1x32x32xbf16> to vector<32x32xbf16>
    %cst_23 = arith.constant dense<0.000000e+00> : vector<1x32xf32>
    %23 = tpu.matmul %13, %22, %cst_23 {dimension_numbers = #tpu.dot_dimension_numbers<[1], [0], [0], [1], [0, 0, 1, 1], [], []>} : vector<1x32xbf16>, vector<32x32xbf16>, vector<1x32xf32> -> vector<1x32xf32>
    %24 = arith.addf %20, %23 : vector<1x32xf32>
    %c0_24 = arith.constant 0 : index
    %c0_25 = arith.constant 0 : index
    %c0_26 = arith.constant 0 : index
    %25 = vector.load %arg10[%c0_24, %c0_25, %c0_26] : memref<4x1x32xf32, #tpu.memory_space<vmem>>, vector<1x1x32xf32>
    %26 = vector.shape_cast %25 : vector<1x1x32xf32> to vector<1x32xf32>
    %27 = arith.addf %24, %26 : vector<1x32xf32>
    %28 = arith.negf %27 : vector<1x32xf32>
    %29 = math.exp %28 : vector<1x32xf32>
    %cst_27 = arith.constant 1.000000e+00 : f32
    %30 = vector.broadcast %cst_27 : f32 to vector<1x32xf32>
    %31 = arith.addf %30, %29 : vector<1x32xf32>
    %32 = arith.divf %30, %31 : vector<1x32xf32>
    %c1 = arith.constant 1 : index
    %c0_28 = arith.constant 0 : index
    %c0_29 = arith.constant 0 : index
    %33 = vector.load %arg7[%c1, %c0_28, %c0_29] : memref<4x32x32xbf16, #tpu.memory_space<vmem>>, vector<1x32x32xbf16>
    %34 = vector.shape_cast %33 : vector<1x32x32xbf16> to vector<32x32xbf16>
    %cst_30 = arith.constant dense<0.000000e+00> : vector<1x32xf32>
    %35 = tpu.matmul %10, %34, %cst_30 {dimension_numbers = #tpu.dot_dimension_numbers<[1], [0], [0], [1], [0, 0, 1, 1], [], []>} : vector<1x32xbf16>, vector<32x32xbf16>, vector<1x32xf32> -> vector<1x32xf32>
    %c1_31 = arith.constant 1 : index
    %c0_32 = arith.constant 0 : index
    %c0_33 = arith.constant 0 : index
    %36 = vector.load %arg8[%c1_31, %c0_32, %c0_33] : memref<4x32x32xbf16, #tpu.memory_space<vmem>>, vector<1x32x32xbf16>
    %37 = vector.shape_cast %36 : vector<1x32x32xbf16> to vector<32x32xbf16>
    %cst_34 = arith.constant dense<0.000000e+00> : vector<1x32xf32>
    %38 = tpu.matmul %9, %37, %cst_34 {dimension_numbers = #tpu.dot_dimension_numbers<[1], [0], [0], [1], [0, 0, 1, 1], [], []>} : vector<1x32xbf16>, vector<32x32xbf16>, vector<1x32xf32> -> vector<1x32xf32>
    %39 = arith.addf %35, %38 : vector<1x32xf32>
    %c1_35 = arith.constant 1 : index
    %c0_36 = arith.constant 0 : index
    %c0_37 = arith.constant 0 : index
    %40 = vector.load %arg9[%c1_35, %c0_36, %c0_37] : memref<4x32x32xbf16, #tpu.memory_space<vmem>>, vector<1x32x32xbf16>
    %41 = vector.shape_cast %40 : vector<1x32x32xbf16> to vector<32x32xbf16>
    %cst_38 = arith.constant dense<0.000000e+00> : vector<1x32xf32>
    %42 = tpu.matmul %13, %41, %cst_38 {dimension_numbers = #tpu.dot_dimension_numbers<[1], [0], [0], [1], [0, 0, 1, 1], [], []>} : vector<1x32xbf16>, vector<32x32xbf16>, vector<1x32xf32> -> vector<1x32xf32>
    %43 = arith.addf %39, %42 : vector<1x32xf32>
    %c1_39 = arith.constant 1 : index
    %c0_40 = arith.constant 0 : index
    %c0_41 = arith.constant 0 : index
    %44 = vector.load %arg10[%c1_39, %c0_40, %c0_41] : memref<4x1x32xf32, #tpu.memory_space<vmem>>, vector<1x1x32xf32>
    %45 = vector.shape_cast %44 : vector<1x1x32xf32> to vector<1x32xf32>
    %46 = arith.addf %43, %45 : vector<1x32xf32>
    %47 = arith.negf %46 : vector<1x32xf32>
    %48 = math.exp %47 : vector<1x32xf32>
    %cst_42 = arith.constant 1.000000e+00 : f32
    %49 = vector.broadcast %cst_42 : f32 to vector<1x32xf32>
    %50 = arith.addf %49, %48 : vector<1x32xf32>
    %51 = arith.divf %49, %50 : vector<1x32xf32>
    %c2 = arith.constant 2 : index
    %c0_43 = arith.constant 0 : index
    %c0_44 = arith.constant 0 : index
    %52 = vector.load %arg7[%c2, %c0_43, %c0_44] : memref<4x32x32xbf16, #tpu.memory_space<vmem>>, vector<1x32x32xbf16>
    %53 = vector.shape_cast %52 : vector<1x32x32xbf16> to vector<32x32xbf16>
    %cst_45 = arith.constant dense<0.000000e+00> : vector<1x32xf32>
    %54 = tpu.matmul %10, %53, %cst_45 {dimension_numbers = #tpu.dot_dimension_numbers<[1], [0], [0], [1], [0, 0, 1, 1], [], []>} : vector<1x32xbf16>, vector<32x32xbf16>, vector<1x32xf32> -> vector<1x32xf32>
    %c2_46 = arith.constant 2 : index
    %c0_47 = arith.constant 0 : index
    %c0_48 = arith.constant 0 : index
    %55 = vector.load %arg8[%c2_46, %c0_47, %c0_48] : memref<4x32x32xbf16, #tpu.memory_space<vmem>>, vector<1x32x32xbf16>
    %56 = vector.shape_cast %55 : vector<1x32x32xbf16> to vector<32x32xbf16>
    %cst_49 = arith.constant dense<0.000000e+00> : vector<1x32xf32>
    %57 = tpu.matmul %9, %56, %cst_49 {dimension_numbers = #tpu.dot_dimension_numbers<[1], [0], [0], [1], [0, 0, 1, 1], [], []>} : vector<1x32xbf16>, vector<32x32xbf16>, vector<1x32xf32> -> vector<1x32xf32>
    %58 = arith.addf %54, %57 : vector<1x32xf32>
    %c2_50 = arith.constant 2 : index
    %c0_51 = arith.constant 0 : index
    %c0_52 = arith.constant 0 : index
    %59 = vector.load %arg9[%c2_50, %c0_51, %c0_52] : memref<4x32x32xbf16, #tpu.memory_space<vmem>>, vector<1x32x32xbf16>
    %60 = vector.shape_cast %59 : vector<1x32x32xbf16> to vector<32x32xbf16>
    %cst_53 = arith.constant dense<0.000000e+00> : vector<1x32xf32>
    %61 = tpu.matmul %13, %60, %cst_53 {dimension_numbers = #tpu.dot_dimension_numbers<[1], [0], [0], [1], [0, 0, 1, 1], [], []>} : vector<1x32xbf16>, vector<32x32xbf16>, vector<1x32xf32> -> vector<1x32xf32>
    %62 = arith.addf %58, %61 : vector<1x32xf32>
    %c2_54 = arith.constant 2 : index
    %c0_55 = arith.constant 0 : index
    %c0_56 = arith.constant 0 : index
    %63 = vector.load %arg10[%c2_54, %c0_55, %c0_56] : memref<4x1x32xf32, #tpu.memory_space<vmem>>, vector<1x1x32xf32>
    %64 = vector.shape_cast %63 : vector<1x1x32xf32> to vector<1x32xf32>
    %65 = arith.addf %62, %64 : vector<1x32xf32>
    %66 = math.tanh %65 : vector<1x32xf32>
    %c3 = arith.constant 3 : index
    %c0_57 = arith.constant 0 : index
    %c0_58 = arith.constant 0 : index
    %67 = vector.load %arg7[%c3, %c0_57, %c0_58] : memref<4x32x32xbf16, #tpu.memory_space<vmem>>, vector<1x32x32xbf16>
    %68 = vector.shape_cast %67 : vector<1x32x32xbf16> to vector<32x32xbf16>
    %cst_59 = arith.constant dense<0.000000e+00> : vector<1x32xf32>
    %69 = tpu.matmul %10, %68, %cst_59 {dimension_numbers = #tpu.dot_dimension_numbers<[1], [0], [0], [1], [0, 0, 1, 1], [], []>} : vector<1x32xbf16>, vector<32x32xbf16>, vector<1x32xf32> -> vector<1x32xf32>
    %c3_60 = arith.constant 3 : index
    %c0_61 = arith.constant 0 : index
    %c0_62 = arith.constant 0 : index
    %70 = vector.load %arg8[%c3_60, %c0_61, %c0_62] : memref<4x32x32xbf16, #tpu.memory_space<vmem>>, vector<1x32x32xbf16>
    %71 = vector.shape_cast %70 : vector<1x32x32xbf16> to vector<32x32xbf16>
    %cst_63 = arith.constant dense<0.000000e+00> : vector<1x32xf32>
    %72 = tpu.matmul %9, %71, %cst_63 {dimension_numbers = #tpu.dot_dimension_numbers<[1], [0], [0], [1], [0, 0, 1, 1], [], []>} : vector<1x32xbf16>, vector<32x32xbf16>, vector<1x32xf32> -> vector<1x32xf32>
    %73 = arith.addf %69, %72 : vector<1x32xf32>
    %c3_64 = arith.constant 3 : index
    %c0_65 = arith.constant 0 : index
    %c0_66 = arith.constant 0 : index
    %74 = vector.load %arg9[%c3_64, %c0_65, %c0_66] : memref<4x32x32xbf16, #tpu.memory_space<vmem>>, vector<1x32x32xbf16>
    %75 = vector.shape_cast %74 : vector<1x32x32xbf16> to vector<32x32xbf16>
    %cst_67 = arith.constant dense<0.000000e+00> : vector<1x32xf32>
    %76 = tpu.matmul %13, %75, %cst_67 {dimension_numbers = #tpu.dot_dimension_numbers<[1], [0], [0], [1], [0, 0, 1, 1], [], []>} : vector<1x32xbf16>, vector<32x32xbf16>, vector<1x32xf32> -> vector<1x32xf32>
    %77 = arith.addf %73, %76 : vector<1x32xf32>
    %c3_68 = arith.constant 3 : index
    %c0_69 = arith.constant 0 : index
    %c0_70 = arith.constant 0 : index
    %78 = vector.load %arg10[%c3_68, %c0_69, %c0_70] : memref<4x1x32xf32, #tpu.memory_space<vmem>>, vector<1x1x32xf32>
    %79 = vector.shape_cast %78 : vector<1x1x32xf32> to vector<1x32xf32>
    %80 = arith.addf %77, %79 : vector<1x32xf32>
    %81 = arith.negf %80 : vector<1x32xf32>
    %82 = math.exp %81 : vector<1x32xf32>
    %cst_71 = arith.constant 1.000000e+00 : f32
    %83 = vector.broadcast %cst_71 : f32 to vector<1x32xf32>
    %84 = arith.addf %83, %82 : vector<1x32xf32>
    %85 = arith.divf %83, %84 : vector<1x32xf32>
    %c0_72 = arith.constant 0 : index
    %c0_73 = arith.constant 0 : index
    %c0_74 = arith.constant 0 : index
    %86 = vector.load %arg5[%c0_72, %c0_73, %c0_74] : memref<1x1x32xf32, #tpu.memory_space<vmem>>, vector<1x1x32xf32>
    %87 = vector.shape_cast %86 : vector<1x1x32xf32> to vector<1x32xf32>
    %88 = arith.mulf %51, %87 : vector<1x32xf32>
    %89 = arith.mulf %32, %66 : vector<1x32xf32>
    %90 = arith.addf %88, %89 : vector<1x32xf32>
    %91 = math.tanh %90 : vector<1x32xf32>
    %92 = arith.mulf %85, %91 : vector<1x32xf32>
    %c0_75 = arith.constant 0 : index
    %c0_76 = arith.constant 0 : index
    %c0_77 = arith.constant 0 : index
    %93 = vector.load %arg19[%c0_75, %c0_76, %c0_77] : memref<1x1x32xf32, #tpu.memory_space<vmem>>, vector<1x1x32xf32>
    %94 = vector.shape_cast %93 : vector<1x1x32xf32> to vector<1x32xf32>
    %95 = vector.shape_cast %92 : vector<1x32xf32> to vector<1x1x32xf32>
    tpu.vector_store %arg19[%c0_75, %c0_76, %c0_77], %95 {strides = array<i32>} : memref<1x1x32xf32, #tpu.memory_space<vmem>>, vector<1x1x32xf32>,
    %c0_78 = arith.constant 0 : index
    %c0_79 = arith.constant 0 : index
    %c0_80 = arith.constant 0 : index
    %96 = vector.load %arg20[%c0_78, %c0_79, %c0_80] : memref<1x1x32xf32, #tpu.memory_space<vmem>>, vector<1x1x32xf32>
    %97 = vector.shape_cast %96 : vector<1x1x32xf32> to vector<1x32xf32>
    %98 = vector.shape_cast %90 : vector<1x32xf32> to vector<1x1x32xf32>
    tpu.vector_store %arg20[%c0_78, %c0_79, %c0_80], %98 {strides = array<i32>} : memref<1x1x32xf32, #tpu.memory_space<vmem>>, vector<1x1x32xf32>,
    %99 = vector.shape_cast %92 : vector<1x32xf32> to vector<1x1x32xf32>
    %c0_81 = arith.constant 0 : index
    %c0_82 = arith.constant 0 : index
    %c0_83 = arith.constant 0 : index
    %100 = vector.load %arg11[%c0_81, %c0_82, %c0_83] : memref<1x8x32xf32, #tpu.memory_space<vmem>>, vector<1x8x32xf32>
    %101 = vector.broadcast %99 : vector<1x1x32xf32> to vector<1x8x32xf32>
    %102 = arith.mulf %101, %100 : vector<1x8x32xf32>
    %103 = arith.truncf %102 : vector<1x8x32xf32> to vector<1x8x32xbf16>
    "tpu.trace_start"() <{level = 10 : i32, message = "bnc,bhc->bnh"}> : () -> ()
    %cst_84 = arith.constant dense<0.000000e+00> : vector<1x64x8xf32>
    %104 = tpu.matmul %0, %103, %cst_84 {dimension_numbers = #tpu.dot_dimension_numbers<[2], [2], [1], [1], [0, 0, 0, 1, 1, 1], [0], [0]>} : vector<1x64x32xbf16>, vector<1x8x32xbf16>, vector<1x64x8xf32> -> vector<1x64x8xf32>
    "tpu.trace_stop"() : () -> ()
    %cst_85 = arith.constant dense<0xFF800000> : vector<1x8xf32>
    %105 = vector.multi_reduction <maximumf>, %104, %cst_85 [1] : vector<1x64x8xf32> to vector<1x8xf32>
    %106 = vector.shape_cast %105 : vector<1x8xf32> to vector<1x1x8xf32>
    %107 = vector.broadcast %106 : vector<1x1x8xf32> to vector<1x64x8xf32>
    %108 = arith.subf %104, %107 : vector<1x64x8xf32>
    %109 = math.exp %108 : vector<1x64x8xf32>
    %cst_86 = arith.constant dense<0.000000e+00> : vector<1x8xf32>
    %110 = vector.multi_reduction <add>, %109, %cst_86 [1] : vector<1x64x8xf32> to vector<1x8xf32>
    %111 = vector.shape_cast %110 : vector<1x8xf32> to vector<1x1x8xf32>
    %112 = tpu.reciprocal %111 {approx = true} : vector<1x1x8xf32> -> vector<1x1x8xf32>
    %113 = vector.broadcast %112 : vector<1x1x8xf32> to vector<1x64x8xf32>
    %114 = arith.mulf %109, %113 : vector<1x64x8xf32>
    %115 = arith.truncf %114 : vector<1x64x8xf32> to vector<1x64x8xbf16>
    %c0_87 = arith.constant 0 : index
    %c0_88 = arith.constant 0 : index
    %c0_89 = arith.constant 0 : index
    %116 = vector.load %arg12[%c0_87, %c0_88, %c0_89] : memref<1x8x32xbf16, #tpu.memory_space<vmem>>, vector<1x8x32xbf16>
    "tpu.trace_start"() <{level = 10 : i32, message = "bnh,bhc->bnc"}> : () -> ()
    %cst_90 = arith.constant dense<0.000000e+00> : vector<1x64x32xf32>
    %117 = tpu.matmul %115, %116, %cst_90 {dimension_numbers = #tpu.dot_dimension_numbers<[2], [1], [1], [2], [0, 0, 0, 1, 1, 2], [0], [0]>} : vector<1x64x8xbf16>, vector<1x8x32xbf16>, vector<1x64x32xf32> -> vector<1x64x32xf32>
    "tpu.trace_stop"() : () -> ()
    %118 = arith.mulf %117, %1 : vector<1x64x32xf32>
    %cst_91 = arith.constant dense<0.000000e+00> : vector<1x32xf32>
    %119 = vector.multi_reduction <add>, %118, %cst_91 [1] : vector<1x64x32xf32> to vector<1x32xf32>
    %120 = arith.truncf %119 : vector<1x32xf32> to vector<1x32xbf16>
    %121 = arith.truncf %92 : vector<1x32xf32> to vector<1x32xbf16>
    %c0_92 = arith.constant 0 : index
    %c0_93 = arith.constant 0 : index
    %c0_94 = arith.constant 0 : index
    %c0_95 = arith.constant 0 : index
    %122 = vector.load %arg13[%c0_92, %c0_93, %c0_94, %c0_95] : memref<2x2x32x32xbf16, #tpu.memory_space<vmem>>, vector<1x1x32x32xbf16>
    %123 = vector.shape_cast %122 : vector<1x1x32x32xbf16> to vector<32x32xbf16>
    %cst_96 = arith.constant dense<0.000000e+00> : vector<1x32xf32>
    %124 = tpu.matmul %120, %123, %cst_96 {dimension_numbers = #tpu.dot_dimension_numbers<[1], [0], [0], [1], [0, 0, 1, 1], [], []>} : vector<1x32xbf16>, vector<32x32xbf16>, vector<1x32xf32> -> vector<1x32xf32>
    %c1_97 = arith.constant 1 : index
    %c0_98 = arith.constant 0 : index
    %c0_99 = arith.constant 0 : index
    %c0_100 = arith.constant 0 : index
    %125 = vector.load %arg13[%c1_97, %c0_98, %c0_99, %c0_100] : memref<2x2x32x32xbf16, #tpu.memory_space<vmem>>, vector<1x1x32x32xbf16>
    %126 = vector.shape_cast %125 : vector<1x1x32x32xbf16> to vector<32x32xbf16>
    %cst_101 = arith.constant dense<0.000000e+00> : vector<1x32xf32>
    %127 = tpu.matmul %121, %126, %cst_101 {dimension_numbers = #tpu.dot_dimension_numbers<[1], [0], [0], [1], [0, 0, 1, 1], [], []>} : vector<1x32xbf16>, vector<32x32xbf16>, vector<1x32xf32> -> vector<1x32xf32>
    %128 = arith.addf %124, %127 : vector<1x32xf32>
    %c0_102 = arith.constant 0 : index
    %c0_103 = arith.constant 0 : index
    %c0_104 = arith.constant 0 : index
    %129 = vector.load %arg14[%c0_102, %c0_103, %c0_104] : memref<2x1x32xf32, #tpu.memory_space<vmem>>, vector<1x1x32xf32>
    %130 = vector.shape_cast %129 : vector<1x1x32xf32> to vector<1x32xf32>
    %131 = arith.addf %128, %130 : vector<1x32xf32>
    %c0_105 = arith.constant 0 : index
    %c1_106 = arith.constant 1 : index
    %c0_107 = arith.constant 0 : index
    %c0_108 = arith.constant 0 : index
    %132 = vector.load %arg13[%c0_105, %c1_106, %c0_107, %c0_108] : memref<2x2x32x32xbf16, #tpu.memory_space<vmem>>, vector<1x1x32x32xbf16>
    %133 = vector.shape_cast %132 : vector<1x1x32x32xbf16> to vector<32x32xbf16>
    %cst_109 = arith.constant dense<0.000000e+00> : vector<1x32xf32>
    %134 = tpu.matmul %120, %133, %cst_109 {dimension_numbers = #tpu.dot_dimension_numbers<[1], [0], [0], [1], [0, 0, 1, 1], [], []>} : vector<1x32xbf16>, vector<32x32xbf16>, vector<1x32xf32> -> vector<1x32xf32>
    %c1_110 = arith.constant 1 : index
    %c1_111 = arith.constant 1 : index
    %c0_112 = arith.constant 0 : index
    %c0_113 = arith.constant 0 : index
    %135 = vector.load %arg13[%c1_110, %c1_111, %c0_112, %c0_113] : memref<2x2x32x32xbf16, #tpu.memory_space<vmem>>, vector<1x1x32x32xbf16>
    %136 = vector.shape_cast %135 : vector<1x1x32x32xbf16> to vector<32x32xbf16>
    %cst_114 = arith.constant dense<0.000000e+00> : vector<1x32xf32>
    %137 = tpu.matmul %121, %136, %cst_114 {dimension_numbers = #tpu.dot_dimension_numbers<[1], [0], [0], [1], [0, 0, 1, 1], [], []>} : vector<1x32xbf16>, vector<32x32xbf16>, vector<1x32xf32> -> vector<1x32xf32>
    %138 = arith.addf %134, %137 : vector<1x32xf32>
    %c1_115 = arith.constant 1 : index
    %c0_116 = arith.constant 0 : index
    %c0_117 = arith.constant 0 : index
    %139 = vector.load %arg14[%c1_115, %c0_116, %c0_117] : memref<2x1x32xf32, #tpu.memory_space<vmem>>, vector<1x1x32xf32>
    %140 = vector.shape_cast %139 : vector<1x1x32xf32> to vector<1x32xf32>
    %141 = arith.addf %138, %140 : vector<1x32xf32>
    %142 = arith.negf %141 : vector<1x32xf32>
    %143 = math.exp %142 : vector<1x32xf32>
    %cst_118 = arith.constant 1.000000e+00 : f32
    %144 = vector.broadcast %cst_118 : f32 to vector<1x32xf32>
    %145 = arith.addf %144, %143 : vector<1x32xf32>
    %146 = arith.divf %144, %145 : vector<1x32xf32>
    %147 = arith.mulf %131, %146 : vector<1x32xf32>
    %c0_119 = arith.constant 0 : index
    %c0_120 = arith.constant 0 : index
    %c0_121 = arith.constant 0 : index
    %148 = vector.load %arg18[%c0_119, %c0_120, %c0_121] : memref<1x1x32xf32, #tpu.memory_space<vmem>>, vector<1x1x32xf32>
    %149 = vector.shape_cast %148 : vector<1x1x32xf32> to vector<1x32xf32>
    %150 = vector.shape_cast %147 : vector<1x32xf32> to vector<1x1x32xf32>
    tpu.vector_store %arg18[%c0_119, %c0_120, %c0_121], %150 {strides = array<i32>} : memref<1x1x32xf32, #tpu.memory_space<vmem>>, vector<1x1x32xf32>,
    %151 = arith.truncf %147 : vector<1x32xf32> to vector<1x32xbf16>
    %c0_122 = arith.constant 0 : index
    %c0_123 = arith.constant 0 : index
    %152 = vector.load %arg15[%c0_122, %c0_123] : memref<32x128xbf16, #tpu.memory_space<vmem>>, vector<32x128xbf16>
    %cst_124 = arith.constant dense<0.000000e+00> : vector<1x128xf32>
    %153 = tpu.matmul %151, %152, %cst_124 {dimension_numbers = #tpu.dot_dimension_numbers<[1], [0], [0], [1], [0, 0, 1, 1], [], []>} : vector<1x32xbf16>, vector<32x128xbf16>, vector<1x128xf32> -> vector<1x128xf32>
    %c0_125 = arith.constant 0 : index
    %c0_126 = arith.constant 0 : index
    %154 = vector.load %arg16[%c0_125, %c0_126] : memref<1x128xf32, #tpu.memory_space<vmem>>, vector<1x128xf32>
    %155 = arith.addf %153, %154 : vector<1x128xf32>
    %c0_127 = arith.constant 0 : index
    %c0_128 = arith.constant 0 : index
    %c0_129 = arith.constant 0 : index
    %156 = vector.load %arg17[%c0_127, %c0_128, %c0_129] : memref<1x1x128xf32, #tpu.memory_space<vmem>>, vector<1x1x128xf32>
    %157 = vector.shape_cast %156 : vector<1x1x128xf32> to vector<1x128xf32>
    %158 = vector.shape_cast %155 : vector<1x128xf32> to vector<1x1x128xf32>
    tpu.vector_store %arg17[%c0_127, %c0_128, %c0_129], %158 {strides = array<i32>} : memref<1x1x128xf32, #tpu.memory_space<vmem>>, vector<1x1x128xf32>,
    return
  }
  func.func @transform_0(%arg0: i32, %arg1: memref<2xi32, #tpu.memory_space<smem>>) -> (i32, i32, i32) {
    %c0_i32 = arith.constant 0 : i32
    %c0_i32_0 = arith.constant 0 : i32
    %c0_i32_1 = arith.constant 0 : i32
    return %arg0, %c0_i32, %c0_i32_0 : i32, i32, i32
  }
  func.func @transform_1(%arg0: i32, %arg1: memref<2xi32, #tpu.memory_space<smem>>) -> (i32, i32, i32) {
    %c0_i32 = arith.constant 0 : i32
    %c0_i32_0 = arith.constant 0 : i32
    %c0_i32_1 = arith.constant 0 : i32
    return %arg0, %c0_i32, %c0_i32_0 : i32, i32, i32
  }
  func.func @transform_2(%arg0: i32, %arg1: memref<2xi32, #tpu.memory_space<smem>>) -> (i32, i32, i32) {
    %c0_i32 = arith.constant 0 : i32
    %c0_i32_0 = arith.constant 0 : i32
    %c0_i32_1 = arith.constant 0 : i32
    return %arg0, %c0_i32, %c0_i32_0 : i32, i32, i32
  }
  func.func @transform_3(%arg0: i32, %arg1: memref<2xi32, #tpu.memory_space<smem>>) -> (i32, i32, i32) {
    %c0_i32 = arith.constant 0 : i32
    %c0_i32_0 = arith.constant 0 : i32
    %c0_i32_1 = arith.constant 0 : i32
    return %arg0, %c0_i32, %c0_i32_0 : i32, i32, i32
  }
  func.func @transform_4(%arg0: i32, %arg1: memref<2xi32, #tpu.memory_space<smem>>) -> (i32, i32, i32) {
    %0 = arith.index_cast %arg0 : i32 to index
    %1 = memref.load %arg1[%0] : memref<2xi32, #tpu.memory_space<smem>>
    %c0_i32 = arith.constant 0 : i32
    %c0_i32_0 = arith.constant 0 : i32
    %c0_i32_1 = arith.constant 0 : i32
    return %1, %c0_i32, %c0_i32_0 : i32, i32, i32
  }
  func.func @transform_5(%arg0: i32, %arg1: memref<2xi32, #tpu.memory_space<smem>>) -> (i32, i32, i32) {
    %c0_i32 = arith.constant 0 : i32
    %c0_i32_0 = arith.constant 0 : i32
    %c0_i32_1 = arith.constant 0 : i32
    %c0_i32_2 = arith.constant 0 : i32
    return %c0_i32, %c0_i32_0, %c0_i32_1 : i32, i32, i32
  }
  func.func @transform_6(%arg0: i32, %arg1: memref<2xi32, #tpu.memory_space<smem>>) -> (i32, i32, i32) {
    %c0_i32 = arith.constant 0 : i32
    %c0_i32_0 = arith.constant 0 : i32
    %c0_i32_1 = arith.constant 0 : i32
    %c0_i32_2 = arith.constant 0 : i32
    return %c0_i32, %c0_i32_0, %c0_i32_1 : i32, i32, i32
  }
  func.func @transform_7(%arg0: i32, %arg1: memref<2xi32, #tpu.memory_space<smem>>) -> (i32, i32, i32) {
    %c0_i32 = arith.constant 0 : i32
    %c0_i32_0 = arith.constant 0 : i32
    %c0_i32_1 = arith.constant 0 : i32
    %c0_i32_2 = arith.constant 0 : i32
    return %c0_i32, %c0_i32_0, %c0_i32_1 : i32, i32, i32
  }
  func.func @transform_8(%arg0: i32, %arg1: memref<2xi32, #tpu.memory_space<smem>>) -> (i32, i32, i32) {
    %c0_i32 = arith.constant 0 : i32
    %c0_i32_0 = arith.constant 0 : i32
    %c0_i32_1 = arith.constant 0 : i32
    %c0_i32_2 = arith.constant 0 : i32
    return %c0_i32, %c0_i32_0, %c0_i32_1 : i32, i32, i32
  }
  func.func @transform_9(%arg0: i32, %arg1: memref<2xi32, #tpu.memory_space<smem>>) -> (i32, i32, i32) {
    %c0_i32 = arith.constant 0 : i32
    %c0_i32_0 = arith.constant 0 : i32
    %c0_i32_1 = arith.constant 0 : i32
    %c0_i32_2 = arith.constant 0 : i32
    return %c0_i32, %c0_i32_0, %c0_i32_1 : i32, i32, i32
  }
  func.func @transform_10(%arg0: i32, %arg1: memref<2xi32, #tpu.memory_space<smem>>) -> (i32, i32, i32) {
    %c0_i32 = arith.constant 0 : i32
    %c0_i32_0 = arith.constant 0 : i32
    %c0_i32_1 = arith.constant 0 : i32
    %c0_i32_2 = arith.constant 0 : i32
    return %c0_i32, %c0_i32_0, %c0_i32_1 : i32, i32, i32
  }
  func.func @transform_11(%arg0: i32, %arg1: memref<2xi32, #tpu.memory_space<smem>>) -> (i32, i32, i32, i32) {
    %c0_i32 = arith.constant 0 : i32
    %c0_i32_0 = arith.constant 0 : i32
    %c0_i32_1 = arith.constant 0 : i32
    %c0_i32_2 = arith.constant 0 : i32
    %c0_i32_3 = arith.constant 0 : i32
    return %c0_i32, %c0_i32_0, %c0_i32_1, %c0_i32_2 : i32, i32, i32, i32
  }
  func.func @transform_12(%arg0: i32, %arg1: memref<2xi32, #tpu.memory_space<smem>>) -> (i32, i32, i32) {
    %c0_i32 = arith.constant 0 : i32
    %c0_i32_0 = arith.constant 0 : i32
    %c0_i32_1 = arith.constant 0 : i32
    %c0_i32_2 = arith.constant 0 : i32
    return %c0_i32, %c0_i32_0, %c0_i32_1 : i32, i32, i32
  }
  func.func @transform_13(%arg0: i32, %arg1: memref<2xi32, #tpu.memory_space<smem>>) -> (i32, i32) {
    %c0_i32 = arith.constant 0 : i32
    %c0_i32_0 = arith.constant 0 : i32
    %c0_i32_1 = arith.constant 0 : i32
    return %c0_i32, %c0_i32_0 : i32, i32
  }
  func.func @transform_14(%arg0: i32, %arg1: memref<2xi32, #tpu.memory_space<smem>>) -> (i32, i32) {
    %c0_i32 = arith.constant 0 : i32
    %c0_i32_0 = arith.constant 0 : i32
    %c0_i32_1 = arith.constant 0 : i32
    return %c0_i32, %c0_i32_0 : i32, i32
  }
  func.func @transform_15(%arg0: i32, %arg1: memref<2xi32, #tpu.memory_space<smem>>) -> (i32, i32, i32) {
    %c0_i32 = arith.constant 0 : i32
    %c0_i32_0 = arith.constant 0 : i32
    %c0_i32_1 = arith.constant 0 : i32
    return %arg0, %c0_i32, %c0_i32_0 : i32, i32, i32
  }
  func.func @transform_16(%arg0: i32, %arg1: memref<2xi32, #tpu.memory_space<smem>>) -> (i32, i32, i32) {
    %c0_i32 = arith.constant 0 : i32
    %c0_i32_0 = arith.constant 0 : i32
    %c0_i32_1 = arith.constant 0 : i32
    return %arg0, %c0_i32, %c0_i32_0 : i32, i32, i32
  }
  func.func @transform_17(%arg0: i32, %arg1: memref<2xi32, #tpu.memory_space<smem>>) -> (i32, i32, i32) {
    %c0_i32 = arith.constant 0 : i32
    %c0_i32_0 = arith.constant 0 : i32
    %c0_i32_1 = arith.constant 0 : i32
    return %arg0, %c0_i32, %c0_i32_0 : i32, i32, i32
  }
  func.func @transform_18(%arg0: i32, %arg1: memref<2xi32, #tpu.memory_space<smem>>) -> (i32, i32, i32) {
    %c0_i32 = arith.constant 0 : i32
    %c0_i32_0 = arith.constant 0 : i32
    %c0_i32_1 = arith.constant 0 : i32
    return %arg0, %c0_i32, %c0_i32_0 : i32, i32, i32
  }
}

</mosaic_0001>

<llo_original>
// kernel: tpu_custom_call.1
$region0: #{tpu_custom_call.1}
  #allocation0 [shape = 'u32[]', space=smem, size = 0x4, offset = 0x4, fixed_abs, tag = 'smem constant byte address 0x4 - core index']
  #allocation1 [shape = 'u32[144,128]{1,0:T(1,128)}', space=vmem, size = 0x12000, scoped, tag = 'internal scratch']
  #allocation2 [shape = 's32[1]{0}', space=sflag, size = 0x4, scoped, tag = 'scoped memory for tpu_custom_call.1']
  #allocation3 [shape = 'u8[512]{0}', space=smem, size = 0x200, scoped, tag = 'prefetched SMEM operand 0']
  %s0 = inlined_call_operand.vmem [shape: s32[2], index: 0, kind: input, shape index: {}]
  %s1 = inlined_call_operand.vmem [shape: bf16[2,64,32], index: 1, kind: input, shape index: {}]
  %s2 = inlined_call_operand.hbm [shape: f32[2,1,32], index: 2, kind: input, shape index: {}]
  %s3 = inlined_call_operand.hbm [shape: f32[2,1,32], index: 3, kind: input, shape index: {}]
  %s4 = inlined_call_operand.hbm [shape: f32[2,1,32], index: 4, kind: input, shape index: {}]
  %s5 = inlined_call_operand.vmem [shape: bf16[64,1,32], index: 5, kind: input, shape index: {}]
  %s6 = inlined_call_operand.vmem [shape: bf16[4,32,32], index: 6, kind: input, shape index: {}]
  %s7 = inlined_call_operand.vmem [shape: bf16[4,32,32], index: 7, kind: input, shape index: {}]
  %s8 = inlined_call_operand.vmem [shape: bf16[4,32,32], index: 8, kind: input, shape index: {}]
  %s9 = inlined_call_operand.hbm [shape: f32[4,1,32], index: 9, kind: input, shape index: {}]
  %s10 = inlined_call_operand.hbm [shape: f32[1,8,32], index: 10, kind: input, shape index: {}]
  %s11 = inlined_call_operand.vmem [shape: bf16[1,8,32], index: 11, kind: input, shape index: {}]
  %s12 = inlined_call_operand.hbm [shape: bf16[2,2,32,32], index: 12, kind: input, shape index: {}]
  %s13 = inlined_call_operand.vmem [shape: f32[2,1,32], index: 13, kind: input, shape index: {}]
  %s14 = inlined_call_operand.vmem [shape: bf16[32,128], index: 14, kind: input, shape index: {}]
  %s15 = inlined_call_operand.vmem [shape: f32[1,128], index: 15, kind: input, shape index: {}]
  %s16 = inlined_call_operand.hbm [shape: f32[2,1,128], index: 16, kind: output, shape index: {0}]
  %s17 = inlined_call_operand.hbm [shape: f32[2,1,32], index: 17, kind: output, shape index: {1}]
  %s18 = inlined_call_operand.hbm [shape: f32[2,1,32], index: 18, kind: output, shape index: {2}]
  %s19 = inlined_call_operand.hbm [shape: f32[2,1,32], index: 19, kind: output, shape index: {3}]
  %20 = xla_tuple %s16, %s17, %s18, %s19
  %s21 = sld [smem:[#allocation0]]
  $region141: #{tpu_custom_call.1} parent=0
    _
  %s23 = ssub.s32 1, %s21
  %s24 = scalar_select 0, %s23, %s21
  %s25 = sshll.u32 %s0, 4
  %s26 = int_to_ptr.vmem [resolvable:$true] %s25
  %28 = dma.vmem_to_smem %s26, 16, [#allocation3], [#allocation2]
  %29 = dma.done [#allocation2], 16
  %30 = sfence
  $region1: #{tpu_custom_call.1} parent=0
    #allocation4 [shape = 'u8[1024]{0}', space=vmem, size = 0x400, scoped, tag = 'input window, operand 2']
    #allocation5 [shape = 's32[2]{0}', space=sflag, size = 0x8, scoped, tag = 'scoped memory for tpu_custom_call.1']
    #allocation6 [shape = 's32[2]{0}', space=sflag, size = 0x8, scoped, tag = 'scoped memory for tpu_custom_call.1']
    #allocation7 [shape = 'u8[1024]{0}', space=vmem, size = 0x400, scoped, tag = 'input window, operand 3']
    #allocation8 [shape = 's32[2]{0}', space=sflag, size = 0x8, scoped, tag = 'scoped memory for tpu_custom_call.1']
    #allocation9 [shape = 'u8[1024]{0}', space=vmem, size = 0x400, scoped, tag = 'input window, operand 4']
    #allocation10 [shape = 'u8[2048]{0}', space=vmem, size = 0x800, scoped, tag = 'input window, operand 9, single buffered']
    #allocation11 [shape = 's32[1]{0}', space=sflag, size = 0x4, scoped, tag = 'scoped memory for tpu_custom_call.1']
    #allocation12 [shape = 'u8[4096]{0}', space=vmem, size = 0x1000, scoped, tag = 'input window, operand 10, single buffered']
    #allocation13 [shape = 'u8[32768]{0}', space=vmem, size = 0x8000, scoped, tag = 'input window, operand 12, single buffered']
    #allocation14 [shape = 's32[1]{0}', space=sflag, size = 0x4, scoped, tag = 'scoped memory for tpu_custom_call.1']
    #allocation15 [shape = 'u8[1024]{0}', space=vmem, size = 0x400, scoped, tag = 'output window, operand 0']
    #allocation16 [shape = 'u8[1024]{0}', space=vmem, size = 0x400, scoped, tag = 'output window, operand 1']
    #allocation17 [shape = 's32[2]{0}', space=sflag, size = 0x8, scoped, tag = 'scoped memory for tpu_custom_call.1']
    #allocation18 [shape = 'u8[1024]{0}', space=vmem, size = 0x400, scoped, tag = 'output window, operand 2']
    #allocation19 [shape = 'u8[1024]{0}', space=vmem, size = 0x400, scoped, tag = 'output window, operand 3']
    #allocation20 [shape = 's32[2]{0}', space=sflag, size = 0x8, scoped, tag = 'scoped memory for tpu_custom_call.1']
    %31 = vsyncpa [#allocation5], 0
    %s32 = scalar_lea.sflag [#allocation5], 1
    %33 = vsyncpa %s32, 0
    %34 = vsyncpa [#allocation8], 0
    %s35 = scalar_lea.sflag [#allocation8], 1
    %36 = vsyncpa %s35, 0
    %37 = vsyncpa [#allocation11], 0
    %38 = vsyncpa [#allocation14], 0
    %39 = vsyncpa [#allocation6], 0
    %s40 = scalar_lea.sflag [#allocation6], 1
    %41 = vsyncpa %s40, 0
    %42 = vsyncpa [#allocation17], 0
    %s43 = scalar_lea.sflag [#allocation17], 1
    %44 = vsyncpa %s43, 0
    %45 = vsyncpa [#allocation20], 0
    %s46 = scalar_lea.sflag [#allocation20], 1
    %47 = vsyncpa %s46, 0
    loop: start=0, step=1, limit=4
    $region2: #{tpu_custom_call.1} parent=1 // loop_pre_header
      _
    $region3: #{tpu_custom_call.1} parent=1 // loop_header
      %s49 = sphi 0, %s53
      %p50 = scmp.ge.s32.totalorder %s49, 4
      %s59 = sphi 0, %s61
      %s62 = sphi 0, %s59
      %s63 = sphi 0, %s62
      %s79 = sphi 0, %s63
      %s85 = sphi 0, %s87
      %s88 = sphi 0, %s85
      %s89 = sphi 0, %s88
      %s105 = sphi 0, %s89
      %s111 = sphi 0, %s113
      %s114 = sphi 0, %s111
      %s115 = sphi 0, %s114
      %s131 = sphi 0, %s115
      %s137 = sphi 0, %s139
      %s140 = sphi 0, %s137
      %s141 = sphi 0, %s140
      %s157 = sphi 0, %s141
      %s165 = sphi 0, %s167
      %s168 = sphi 0, %s165
      %s169 = sphi 0, %s168
      %s185 = sphi 0, %s169
      %s189 = sphi 0, %s189
      %s191 = sphi 0, %s189
      %s192 = sphi 0, %s191
      %s206 = sphi 0, %s192
      %s210 = sphi 0, %s210
      %s212 = sphi 0, %s210
      %s213 = sphi 0, %s212
      %s227 = sphi 0, %s213
      %s231 = sphi 0, %s231
      %s233 = sphi 0, %s231
      %s234 = sphi 0, %s233
      %s248 = sphi 0, %s234
      %s252 = sphi 0, %s252
      %s254 = sphi 0, %s252
      %s255 = sphi 0, %s254
      %s269 = sphi 0, %s255
      %s273 = sphi 0, %s273
      %s275 = sphi 0, %s273
      %s276 = sphi 0, %s275
      %s290 = sphi 0, %s276
      %s294 = sphi 0, %s294
      %s296 = sphi 0, %s294
      %s297 = sphi 0, %s296
      %s311 = sphi 0, %s297
      %s315 = sphi 0, %s315
      %s317 = sphi 0, %s315
      %s318 = sphi 0, %s317
      %s332 = sphi 0, %s318
      %s336 = sphi 0, %s336
      %s338 = sphi 0, %s336
      %s339 = sphi 0, %s338
      %s353 = sphi 0, %s339
      %s357 = sphi 0, %s357
      %s359 = sphi 0, %s357
      %s360 = sphi 0, %s359
      %s374 = sphi 0, %s360
      %s378 = sphi 0, %s378
      %s380 = sphi 0, %s378
      %s381 = sphi 0, %s380
      %s395 = sphi 0, %s381
      %s401 = sphi 0, %s403
      %s404 = sphi 0, %s401
      %s405 = sphi 0, %s404
      %s421 = sphi 0, %s405
      %s427 = sphi 0, %s429
      %s430 = sphi 0, %s427
      %s431 = sphi 0, %s430
      %s447 = sphi 0, %s431
      %s453 = sphi 0, %s455
      %s456 = sphi 0, %s453
      %s457 = sphi 0, %s456
      %s473 = sphi 0, %s457
      %s479 = sphi 0, %s481
      %s482 = sphi 0, %s479
      %s483 = sphi 0, %s482
      %s499 = sphi 0, %s483
    $region4: #{tpu_custom_call.1} parent=1 // loop_header_branch
      %52 = sbr.rel (%p50) target = $region8
    $region5: #{tpu_custom_call.1} parent=1 // loop_body
      %s54 = ssub.s32 %s49, 1
      %s55 = ssub.s32 %s49, 2
      %s56 = sadd.s32 %s49, 1
      %s57 = ssub.s32 %s49, %s56
      %p58 = scmp.eq.s32.totalorder %s57, 0
      %s60 = sadd.s32 %s59, 1
      %s61 = scalar_select %p58, %s59, %s60
      %p64 = pneg %p58
      %p65 = scmp.eq.s32.totalorder %s49, 1
      %p66 = por %p64, %p65
      %p67 = scmp.ne.s32.totalorder %s59, %s62
      %p68 = scmp.eq.s32.totalorder %s49, 0
      %p69 = por %p67, %p68
      %p70 = scmp.ne.s32.totalorder %s59, %s62
      %p71 = scmp.eq.s32.totalorder %s54, 1
      %p72 = por %p70, %p71
      %p73 = scmp.ne.s32.totalorder %s62, %s63
      %p74 = scmp.eq.s32.totalorder %s54, 0
      %p75 = por %p73, %p74
      %p76 = scmp.ne.s32.totalorder %s62, %s63
      %p77 = scmp.eq.s32.totalorder %s55, 1
      %p78 = por %p76, %p77
      %p80 = scmp.ne.s32.totalorder %s63, %s79
      %p81 = scmp.eq.s32.totalorder %s55, 0
      %p82 = por %p80, %p81
      %s83 = ssub.s32 %s49, %s56
      %p84 = scmp.eq.s32.totalorder %s83, 0
      %s86 = sadd.s32 %s85, 1
      %s87 = scalar_select %p84, %s85, %s86
      %p90 = pneg %p84
      %p91 = scmp.eq.s32.totalorder %s49, 1
      %p92 = por %p90, %p91
      %p93 = scmp.ne.s32.totalorder %s85, %s88
      %p94 = scmp.eq.s32.totalorder %s49, 0
      %p95 = por %p93, %p94
      %p96 = scmp.ne.s32.totalorder %s85, %s88
      %p97 = scmp.eq.s32.totalorder %s54, 1
      %p98 = por %p96, %p97
      %p99 = scmp.ne.s32.totalorder %s88, %s89
      %p100 = scmp.eq.s32.totalorder %s54, 0
      %p101 = por %p99, %p100
      %p102 = scmp.ne.s32.totalorder %s88, %s89
      %p103 = scmp.eq.s32.totalorder %s55, 1
      %p104 = por %p102, %p103
      %p106 = scmp.ne.s32.totalorder %s89, %s105
      %p107 = scmp.eq.s32.totalorder %s55, 0
      %p108 = por %p106, %p107
      %s109 = ssub.s32 %s49, %s56
      %p110 = scmp.eq.s32.totalorder %s109, 0
      %s112 = sadd.s32 %s111, 1
      %s113 = scalar_select %p110, %s111, %s112
      %p116 = pneg %p110
      %p117 = scmp.eq.s32.totalorder %s49, 1
      %p118 = por %p116, %p117
      %p119 = scmp.ne.s32.totalorder %s111, %s114
      %p120 = scmp.eq.s32.totalorder %s49, 0
      %p121 = por %p119, %p120
      %p122 = scmp.ne.s32.totalorder %s111, %s114
      %p123 = scmp.eq.s32.totalorder %s54, 1
      %p124 = por %p122, %p123
      %p125 = scmp.ne.s32.totalorder %s114, %s115
      %p126 = scmp.eq.s32.totalorder %s54, 0
      %p127 = por %p125, %p126
      %p128 = scmp.ne.s32.totalorder %s114, %s115
      %p129 = scmp.eq.s32.totalorder %s55, 1
      %p130 = por %p128, %p129
      %p132 = scmp.ne.s32.totalorder %s115, %s131
      %p133 = scmp.eq.s32.totalorder %s55, 0
      %p134 = por %p132, %p133
      %s135 = ssub.s32 %s49, %s56
      %p136 = scmp.eq.s32.totalorder %s135, 0
      %s138 = sadd.s32 %s137, 1
      %s139 = scalar_select %p136, %s137, %s138
      %p142 = pneg %p136
      %p143 = scmp.eq.s32.totalorder %s49, 1
      %p144 = por %p142, %p143
      %p145 = scmp.ne.s32.totalorder %s137, %s140
      %p146 = scmp.eq.s32.totalorder %s49, 0
      %p147 = por %p145, %p146
      %p148 = scmp.ne.s32.totalorder %s137, %s140
      %p149 = scmp.eq.s32.totalorder %s54, 1
      %p150 = por %p148, %p149
      %p151 = scmp.ne.s32.totalorder %s140, %s141
      %p152 = scmp.eq.s32.totalorder %s54, 0
      %p153 = por %p151, %p152
      %p154 = scmp.ne.s32.totalorder %s140, %s141
      %p155 = scmp.eq.s32.totalorder %s55, 1
      %p156 = por %p154, %p155
      %p158 = scmp.ne.s32.totalorder %s141, %s157
      %p159 = scmp.eq.s32.totalorder %s55, 0
      %p160 = por %p158, %p159
      %s161 = sld [smem:[#allocation3 + %s49]]
      %s162 = sld [smem:[#allocation3 + %s56]]
      %s163 = ssub.s32 %s161, %s162
      %p164 = scmp.eq.s32.totalorder %s163, 0
      %s166 = sadd.s32 %s165, 1
      %s167 = scalar_select %p164, %s165, %s166
      %p170 = pneg %p164
      %p171 = scmp.eq.s32.totalorder %s49, 1
      %p172 = por %p170, %p171
      %p173 = scmp.ne.s32.totalorder %s165, %s168
      %p174 = scmp.eq.s32.totalorder %s49, 0
      %p175 = por %p173, %p174
      %p176 = scmp.ne.s32.totalorder %s165, %s168
      %p177 = scmp.eq.s32.totalorder %s54, 1
      %p178 = por %p176, %p177
      %p179 = scmp.ne.s32.totalorder %s168, %s169
      %p180 = scmp.eq.s32.totalorder %s54, 0
      %p181 = por %p179, %p180
      %p182 = scmp.ne.s32.totalorder %s168, %s169
      %p183 = scmp.eq.s32.totalorder %s55, 1
      %p184 = por %p182, %p183
      %p186 = scmp.ne.s32.totalorder %s169, %s185
      %p187 = scmp.eq.s32.totalorder %s55, 0
      %p188 = por %p186, %p187
      %s190 = sadd.s32 %s189, 1
      %p193 = scmp.eq.s32.totalorder %s49, 1
      %p194 = scmp.ne.s32.totalorder %s189, %s191
      %p195 = scmp.eq.s32.totalorder %s49, 0
      %p196 = por %p194, %p195
      %p197 = scmp.ne.s32.totalorder %s189, %s191
      %p198 = scmp.eq.s32.totalorder %s54, 1
      %p199 = por %p197, %p198
      %p200 = scmp.ne.s32.totalorder %s191, %s192
      %p201 = scmp.eq.s32.totalorder %s54, 0
      %p202 = por %p200, %p201
      %p203 = scmp.ne.s32.totalorder %s191, %s192
      %p204 = scmp.eq.s32.totalorder %s55, 1
      %p205 = por %p203, %p204
      %p207 = scmp.ne.s32.totalorder %s192, %s206
      %p208 = scmp.eq.s32.totalorder %s55, 0
      %p209 = por %p207, %p208
      %s211 = sadd.s32 %s210, 1
      %p214 = scmp.eq.s32.totalorder %s49, 1
      %p215 = scmp.ne.s32.totalorder %s210, %s212
      %p216 = scmp.eq.s32.totalorder %s49, 0
      %p217 = por %p215, %p216
      %p218 = scmp.ne.s32.totalorder %s210, %s212
      %p219 = scmp.eq.s32.totalorder %s54, 1
      %p220 = por %p218, %p219
      %p221 = scmp.ne.s32.totalorder %s212, %s213
      %p222 = scmp.eq.s32.totalorder %s54, 0
      %p223 = por %p221, %p222
      %p224 = scmp.ne.s32.totalorder %s212, %s213
      %p225 = scmp.eq.s32.totalorder %s55, 1
      %p226 = por %p224, %p225
      %p228 = scmp.ne.s32.totalorder %s213, %s227
      %p229 = scmp.eq.s32.totalorder %s55, 0
      %p230 = por %p228, %p229
      %s232 = sadd.s32 %s231, 1
      %p235 = scmp.eq.s32.totalorder %s49, 1
      %p236 = scmp.ne.s32.totalorder %s231, %s233
      %p237 = scmp.eq.s32.totalorder %s49, 0
      %p238 = por %p236, %p237
      %p239 = scmp.ne.s32.totalorder %s231, %s233
      %p240 = scmp.eq.s32.totalorder %s54, 1
      %p241 = por %p239, %p240
      %p242 = scmp.ne.s32.totalorder %s233, %s234
      %p243 = scmp.eq.s32.totalorder %s54, 0
      %p244 = por %p242, %p243
      %p245 = scmp.ne.s32.totalorder %s233, %s234
      %p246 = scmp.eq.s32.totalorder %s55, 1
      %p247 = por %p245, %p246
      %p249 = scmp.ne.s32.totalorder %s234, %s248
      %p250 = scmp.eq.s32.totalorder %s55, 0
      %p251 = por %p249, %p250
      %s253 = sadd.s32 %s252, 1
      %p256 = scmp.eq.s32.totalorder %s49, 1
      %p257 = scmp.ne.s32.totalorder %s252, %s254
      %p258 = scmp.eq.s32.totalorder %s49, 0
      %p259 = por %p257, %p258
      %p260 = scmp.ne.s32.totalorder %s252, %s254
      %p261 = scmp.eq.s32.totalorder %s54, 1
      %p262 = por %p260, %p261
      %p263 = scmp.ne.s32.totalorder %s254, %s255
      %p264 = scmp.eq.s32.totalorder %s54, 0
      %p265 = por %p263, %p264
      %p266 = scmp.ne.s32.totalorder %s254, %s255
      %p267 = scmp.eq.s32.totalorder %s55, 1
      %p268 = por %p266, %p267
      %p270 = scmp.ne.s32.totalorder %s255, %s269
      %p271 = scmp.eq.s32.totalorder %s55, 0
      %p272 = por %p270, %p271
      %s274 = sadd.s32 %s273, 1
      %p277 = scmp.eq.s32.totalorder %s49, 1
      %p278 = scmp.ne.s32.totalorder %s273, %s275
      %p279 = scmp.eq.s32.totalorder %s49, 0
      %p280 = por %p278, %p279
      %p281 = scmp.ne.s32.totalorder %s273, %s275
      %p282 = scmp.eq.s32.totalorder %s54, 1
      %p283 = por %p281, %p282
      %p284 = scmp.ne.s32.totalorder %s275, %s276
      %p285 = scmp.eq.s32.totalorder %s54, 0
      %p286 = por %p284, %p285
      %p287 = scmp.ne.s32.totalorder %s275, %s276
      %p288 = scmp.eq.s32.totalorder %s55, 1
      %p289 = por %p287, %p288
      %p291 = scmp.ne.s32.totalorder %s276, %s290
      %p292 = scmp.eq.s32.totalorder %s55, 0
      %p293 = por %p291, %p292
      %s295 = sadd.s32 %s294, 1
      %p298 = scmp.eq.s32.totalorder %s49, 1
      %p299 = scmp.ne.s32.totalorder %s294, %s296
      %p300 = scmp.eq.s32.totalorder %s49, 0
      %p301 = por %p299, %p300
      %p302 = scmp.ne.s32.totalorder %s294, %s296
      %p303 = scmp.eq.s32.totalorder %s54, 1
      %p304 = por %p302, %p303
      %p305 = scmp.ne.s32.totalorder %s296, %s297
      %p306 = scmp.eq.s32.totalorder %s54, 0
      %p307 = por %p305, %p306
      %p308 = scmp.ne.s32.totalorder %s296, %s297
      %p309 = scmp.eq.s32.totalorder %s55, 1
      %p310 = por %p308, %p309
      %p312 = scmp.ne.s32.totalorder %s297, %s311
      %p313 = scmp.eq.s32.totalorder %s55, 0
      %p314 = por %p312, %p313
      %s316 = sadd.s32 %s315, 1
      %p319 = scmp.eq.s32.totalorder %s49, 1
      %p320 = scmp.ne.s32.totalorder %s315, %s317
      %p321 = scmp.eq.s32.totalorder %s49, 0
      %p322 = por %p320, %p321
      %p323 = scmp.ne.s32.totalorder %s315, %s317
      %p324 = scmp.eq.s32.totalorder %s54, 1
      %p325 = por %p323, %p324
      %p326 = scmp.ne.s32.totalorder %s317, %s318
      %p327 = scmp.eq.s32.totalorder %s54, 0
      %p328 = por %p326, %p327
      %p329 = scmp.ne.s32.totalorder %s317, %s318
      %p330 = scmp.eq.s32.totalorder %s55, 1
      %p331 = por %p329, %p330
      %p333 = scmp.ne.s32.totalorder %s318, %s332
      %p334 = scmp.eq.s32.totalorder %s55, 0
      %p335 = por %p333, %p334
      %s337 = sadd.s32 %s336, 1
      %p340 = scmp.eq.s32.totalorder %s49, 1
      %p341 = scmp.ne.s32.totalorder %s336, %s338
      %p342 = scmp.eq.s32.totalorder %s49, 0
      %p343 = por %p341, %p342
      %p344 = scmp.ne.s32.totalorder %s336, %s338
      %p345 = scmp.eq.s32.totalorder %s54, 1
      %p346 = por %p344, %p345
      %p347 = scmp.ne.s32.totalorder %s338, %s339
      %p348 = scmp.eq.s32.totalorder %s54, 0
      %p349 = por %p347, %p348
      %p350 = scmp.ne.s32.totalorder %s338, %s339
      %p351 = scmp.eq.s32.totalorder %s55, 1
      %p352 = por %p350, %p351
      %p354 = scmp.ne.s32.totalorder %s339, %s353
      %p355 = scmp.eq.s32.totalorder %s55, 0
      %p356 = por %p354, %p355
      %s358 = sadd.s32 %s357, 1
      %p361 = scmp.eq.s32.totalorder %s49, 1
      %p362 = scmp.ne.s32.totalorder %s357, %s359
      %p363 = scmp.eq.s32.totalorder %s49, 0
      %p364 = por %p362, %p363
      %p365 = scmp.ne.s32.totalorder %s357, %s359
      %p366 = scmp.eq.s32.totalorder %s54, 1
      %p367 = por %p365, %p366
      %p368 = scmp.ne.s32.totalorder %s359, %s360
      %p369 = scmp.eq.s32.totalorder %s54, 0
      %p370 = por %p368, %p369
      %p371 = scmp.ne.s32.totalorder %s359, %s360
      %p372 = scmp.eq.s32.totalorder %s55, 1
      %p373 = por %p371, %p372
      %p375 = scmp.ne.s32.totalorder %s360, %s374
      %p376 = scmp.eq.s32.totalorder %s55, 0
      %p377 = por %p375, %p376
      %s379 = sadd.s32 %s378, 1
      %p382 = scmp.eq.s32.totalorder %s49, 1
      %p383 = scmp.ne.s32.totalorder %s378, %s380
      %p384 = scmp.eq.s32.totalorder %s49, 0
      %p385 = por %p383, %p384
      %p386 = scmp.ne.s32.totalorder %s378, %s380
      %p387 = scmp.eq.s32.totalorder %s54, 1
      %p388 = por %p386, %p387
      %p389 = scmp.ne.s32.totalorder %s380, %s381
      %p390 = scmp.eq.s32.totalorder %s54, 0
      %p391 = por %p389, %p390
      %p392 = scmp.ne.s32.totalorder %s380, %s381
      %p393 = scmp.eq.s32.totalorder %s55, 1
      %p394 = por %p392, %p393
      %p396 = scmp.ne.s32.totalorder %s381, %s395
      %p397 = scmp.eq.s32.totalorder %s55, 0
      %p398 = por %p396, %p397
      %s399 = ssub.s32 %s49, %s56
      %p400 = scmp.eq.s32.totalorder %s399, 0
      %s402 = sadd.s32 %s401, 1
      %s403 = scalar_select %p400, %s401, %s402
      %p406 = pneg %p400
      %p407 = scmp.eq.s32.totalorder %s49, 1
      %p408 = por %p406, %p407
      %p409 = scmp.ne.s32.totalorder %s401, %s404
      %p410 = scmp.eq.s32.totalorder %s49, 0
      %p411 = por %p409, %p410
      %p412 = scmp.ne.s32.totalorder %s401, %s404
      %p413 = scmp.eq.s32.totalorder %s54, 1
      %p414 = por %p412, %p413
      %p415 = scmp.ne.s32.totalorder %s404, %s405
      %p416 = scmp.eq.s32.totalorder %s54, 0
      %p417 = por %p415, %p416
      %p418 = scmp.ne.s32.totalorder %s404, %s405
      %p419 = scmp.eq.s32.totalorder %s55, 1
      %p420 = por %p418, %p419
      %p422 = scmp.ne.s32.totalorder %s405, %s421
      %p423 = scmp.eq.s32.totalorder %s55, 0
      %p424 = por %p422, %p423
      %s425 = ssub.s32 %s49, %s56
      %p426 = scmp.eq.s32.totalorder %s425, 0
      %s428 = sadd.s32 %s427, 1
      %s429 = scalar_select %p426, %s427, %s428
      %p432 = pneg %p426
      %p433 = scmp.eq.s32.totalorder %s49, 1
      %p434 = por %p432, %p433
      %p435 = scmp.ne.s32.totalorder %s427, %s430
      %p436 = scmp.eq.s32.totalorder %s49, 0
      %p437 = por %p435, %p436
      %p438 = scmp.ne.s32.totalorder %s427, %s430
      %p439 = scmp.eq.s32.totalorder %s54, 1
      %p440 = por %p438, %p439
      %p441 = scmp.ne.s32.totalorder %s430, %s431
      %p442 = scmp.eq.s32.totalorder %s54, 0
      %p443 = por %p441, %p442
      %p444 = scmp.ne.s32.totalorder %s430, %s431
      %p445 = scmp.eq.s32.totalorder %s55, 1
      %p446 = por %p444, %p445
      %p448 = scmp.ne.s32.totalorder %s431, %s447
      %p449 = scmp.eq.s32.totalorder %s55, 0
      %p450 = por %p448, %p449
      %s451 = ssub.s32 %s49, %s56
      %p452 = scmp.eq.s32.totalorder %s451, 0
      %s454 = sadd.s32 %s453, 1
      %s455 = scalar_select %p452, %s453, %s454
      %p458 = pneg %p452
      %p459 = scmp.eq.s32.totalorder %s49, 1
      %p460 = por %p458, %p459
      %p461 = scmp.ne.s32.totalorder %s453, %s456
      %p462 = scmp.eq.s32.totalorder %s49, 0
      %p463 = por %p461, %p462
      %p464 = scmp.ne.s32.totalorder %s453, %s456
      %p465 = scmp.eq.s32.totalorder %s54, 1
      %p466 = por %p464, %p465
      %p467 = scmp.ne.s32.totalorder %s456, %s457
      %p468 = scmp.eq.s32.totalorder %s54, 0
      %p469 = por %p467, %p468
      %p470 = scmp.ne.s32.totalorder %s456, %s457
      %p471 = scmp.eq.s32.totalorder %s55, 1
      %p472 = por %p470, %p471
      %p474 = scmp.ne.s32.totalorder %s457, %s473
      %p475 = scmp.eq.s32.totalorder %s55, 0
      %p476 = por %p474, %p475
      %s477 = ssub.s32 %s49, %s56
      %p478 = scmp.eq.s32.totalorder %s477, 0
      %s480 = sadd.s32 %s479, 1
      %s481 = scalar_select %p478, %s479, %s480
      %p484 = pneg %p478
      %p485 = scmp.eq.s32.totalorder %s49, 1
      %p486 = por %p484, %p485
      %p487 = scmp.ne.s32.totalorder %s479, %s482
      %p488 = scmp.eq.s32.totalorder %s49, 0
      %p489 = por %p487, %p488
      %p490 = scmp.ne.s32.totalorder %s479, %s482
      %p491 = scmp.eq.s32.totalorder %s54, 1
      %p492 = por %p490, %p491
      %p493 = scmp.ne.s32.totalorder %s482, %s483
      %p494 = scmp.eq.s32.totalorder %s54, 0
      %p495 = por %p493, %p494
      %p496 = scmp.ne.s32.totalorder %s482, %s483
      %p497 = scmp.eq.s32.totalorder %s55, 1
      %p498 = por %p496, %p497
      %p500 = scmp.ne.s32.totalorder %s483, %s499
      %p501 = scmp.eq.s32.totalorder %s55, 0
      %p502 = por %p500, %p501
      %p503 = scmp.le.s32.totalorder 1, %s49
      %p504 = scmp.lt.s32.totalorder %s49, 3
      %p505 = pnand %p503, %p504
      %p506 = pneg %p505
      // Predicated region
      $region9: #{tpu_custom_call.1} parent=5 // pred_check
        _
      $region10: #{tpu_custom_call.1} parent=5 // pred_check_branch
        %508 = sbr.rel (%p505) target = $region12
      $region11: #{tpu_custom_call.1} parent=5 // pred_region
        %s509 = ssub.s32 %s49, 1
        // Predicated region
        $region13: #{tpu_custom_call.1} parent=11 // pred_check
          %p510 = pneg %p202
        $region14: #{tpu_custom_call.1} parent=11 // pred_check_branch
          %512 = sbr.rel (%p510) target = $region16
        $region15: #{tpu_custom_call.1} parent=11 // pred_region
          _
        $region16: #{tpu_custom_call.1} parent=11 // pred_fallthru
          _
        // Predicated region
        $region17: #{tpu_custom_call.1} parent=11 // pred_check
          %p513 = pneg %p223
        $region18: #{tpu_custom_call.1} parent=11 // pred_check_branch
          %515 = sbr.rel (%p513) target = $region20
        $region19: #{tpu_custom_call.1} parent=11 // pred_region
          _
        $region20: #{tpu_custom_call.1} parent=11 // pred_fallthru
          _
        // Predicated region
        $region21: #{tpu_custom_call.1} parent=11 // pred_check
          %p516 = pneg %p244
        $region22: #{tpu_custom_call.1} parent=11 // pred_check_branch
          %518 = sbr.rel (%p516) target = $region24
        $region23: #{tpu_custom_call.1} parent=11 // pred_region
          _
        $region24: #{tpu_custom_call.1} parent=11 // pred_fallthru
          _
        // Predicated region
        $region25: #{tpu_custom_call.1} parent=11 // pred_check
          %p519 = pneg %p265
        $region26: #{tpu_custom_call.1} parent=11 // pred_check_branch
          %521 = sbr.rel (%p519) target = $region28
        $region27: #{tpu_custom_call.1} parent=11 // pred_region
          %s523 = ssub.s32 64, 64
          %524 = vsyncadd [#allocation11], %s523
          %s525 = sshll.u32 [#allocation10], 4
          %s526 = int_to_ptr.vmem [resolvable:$true] %s525
          %531 = dma.hbm_to_vmem [thread:$0]  %s9, 64, %s526, [#allocation11], 16, 16, 1
        $region28: #{tpu_custom_call.1} parent=11 // pred_fallthru
          _
        // Predicated region
        $region29: #{tpu_custom_call.1} parent=11 // pred_check
          %p532 = pneg %p286
        $region30: #{tpu_custom_call.1} parent=11 // pred_check_branch
          %534 = sbr.rel (%p532) target = $region32
        $region31: #{tpu_custom_call.1} parent=11 // pred_region
          %s536 = ssub.s32 128, 128
          %537 = vsyncadd [#allocation11], %s536
          %s539 = sshll.u32 [#allocation12], 4
          %s540 = int_to_ptr.vmem [resolvable:$true] %s539
          %542 = dma.hbm_to_vmem [thread:$0]  %s10, 128, %s540, [#allocation11]
        $region32: #{tpu_custom_call.1} parent=11 // pred_fallthru
          _
        // Predicated region
        $region33: #{tpu_custom_call.1} parent=11 // pred_check
          %p543 = pneg %p307
        $region34: #{tpu_custom_call.1} parent=11 // pred_check_branch
          %545 = sbr.rel (%p543) target = $region36
        $region35: #{tpu_custom_call.1} parent=11 // pred_region
          _
        $region36: #{tpu_custom_call.1} parent=11 // pred_fallthru
          _
        // Predicated region
        $region37: #{tpu_custom_call.1} parent=11 // pred_check
          %p546 = pneg %p328
        $region38: #{tpu_custom_call.1} parent=11 // pred_check_branch
          %548 = sbr.rel (%p546) target = $region40
        $region39: #{tpu_custom_call.1} parent=11 // pred_region
          %s550 = ssub.s32 1024, 1024
          %551 = vsyncadd [#allocation14], %s550
          %s552 = sshll.u32 [#allocation13], 4
          %s553 = int_to_ptr.vmem [resolvable:$true] %s552
          %558 = dma.hbm_to_vmem [thread:$0]  %s12, 1024, %s553, [#allocation14], 64, 64, 4
        $region40: #{tpu_custom_call.1} parent=11 // pred_fallthru
          _
        // Predicated region
        $region41: #{tpu_custom_call.1} parent=11 // pred_check
          %p559 = pneg %p349
        $region42: #{tpu_custom_call.1} parent=11 // pred_check_branch
          %561 = sbr.rel (%p559) target = $region44
        $region43: #{tpu_custom_call.1} parent=11 // pred_region
          _
        $region44: #{tpu_custom_call.1} parent=11 // pred_fallthru
          _
        // Predicated region
        $region45: #{tpu_custom_call.1} parent=11 // pred_check
          %p562 = pneg %p370
        $region46: #{tpu_custom_call.1} parent=11 // pred_check_branch
          %564 = sbr.rel (%p562) target = $region48
        $region47: #{tpu_custom_call.1} parent=11 // pred_region
          _
        $region48: #{tpu_custom_call.1} parent=11 // pred_fallthru
          _
        // Predicated region
        $region49: #{tpu_custom_call.1} parent=11 // pred_check
          %p565 = pneg %p391
        $region50: #{tpu_custom_call.1} parent=11 // pred_check_branch
          %567 = sbr.rel (%p565) target = $region52
        $region51: #{tpu_custom_call.1} parent=11 // pred_region
          _
        $region52: #{tpu_custom_call.1} parent=11 // pred_fallthru
          _
      $region12: #{tpu_custom_call.1} parent=5 // pred_fallthru
        _
      %p568 = scmp.lt.s32.totalorder %s49, 2
      // Predicated region
      $region53: #{tpu_custom_call.1} parent=5 // pred_check
        %p569 = pneg %p568
      $region54: #{tpu_custom_call.1} parent=5 // pred_check_branch
        %571 = sbr.rel (%p569) target = $region56
      $region55: #{tpu_custom_call.1} parent=5 // pred_region
        // Predicated region
        $region57: #{tpu_custom_call.1} parent=55 // pred_check
          %p572 = pneg %p69
        $region58: #{tpu_custom_call.1} parent=55 // pred_check_branch
          %574 = sbr.rel (%p572) target = $region60
        $region59: #{tpu_custom_call.1} parent=55 // pred_region
          %p575 = scmp.lt.s32.totalorder %s49, 1
          %s576 = scalar_select %p575, %s49, 1
          %s577 = smul.addr %s576, 8
          %s578 = smul.addr %s577, 4
          %s579 = scalar_lea.vmem %s1, %s578
        $region60: #{tpu_custom_call.1} parent=55 // pred_fallthru
          _
        // Predicated region
        $region61: #{tpu_custom_call.1} parent=55 // pred_check
          %p580 = pneg %p95
        $region62: #{tpu_custom_call.1} parent=55 // pred_check_branch
          %582 = sbr.rel (%p580) target = $region64
        $region63: #{tpu_custom_call.1} parent=55 // pred_region
          %s583 = sand.u32 %s85, 1
          %s584 = scalar_lea.sflag [#allocation5], %s583
          %s585 = sand.u32 %s85, 1
          %s586 = scalar_lea.vmem [#allocation4], %s585
          %s588 = ssub.s32 16, 16
          %589 = vsyncadd %s584, %s588
          %s590 = smul.addr %s49, 16
          %s591 = scalar_lea.hbm %s2, %s590
          %s593 = sshll.u32 %s586, 4
          %s594 = int_to_ptr.vmem [resolvable:$true] %s593
          %596 = dma.hbm_to_vmem [thread:$0]  %s591, 16, %s594, %s584
        $region64: #{tpu_custom_call.1} parent=55 // pred_fallthru
          _
        // Predicated region
        $region65: #{tpu_custom_call.1} parent=55 // pred_check
          %p597 = pneg %p121
        $region66: #{tpu_custom_call.1} parent=55 // pred_check_branch
          %599 = sbr.rel (%p597) target = $region68
        $region67: #{tpu_custom_call.1} parent=55 // pred_region
          %s600 = sand.u32 %s49, 1
          %s601 = scalar_lea.sflag [#allocation8], %s600
          %s602 = sand.u32 %s111, 1
          %s603 = scalar_lea.vmem [#allocation7], %s602
          %s605 = ssub.s32 16, 16
          %606 = vsyncadd %s601, %s605
          %s607 = smul.addr %s49, 16
          %s608 = scalar_lea.hbm %s3, %s607
          %s610 = sshll.u32 %s603, 4
          %s611 = int_to_ptr.vmem [resolvable:$true] %s610
          %613 = dma.hbm_to_vmem [thread:$0]  %s608, 16, %s611, %s601
        $region68: #{tpu_custom_call.1} parent=55 // pred_fallthru
          _
        // Predicated region
        $region69: #{tpu_custom_call.1} parent=55 // pred_check
          %p614 = pneg %p147
        $region70: #{tpu_custom_call.1} parent=55 // pred_check_branch
          %616 = sbr.rel (%p614) target = $region72
        $region71: #{tpu_custom_call.1} parent=55 // pred_region
          %s617 = sand.u32 %s49, 1
          %s618 = scalar_lea.sflag [#allocation8], %s617
          %s619 = sand.u32 %s137, 1
          %s620 = scalar_lea.vmem [#allocation9], %s619
          %s622 = ssub.s32 16, 16
          %623 = vsyncadd %s618, %s622
          %s624 = smul.addr %s49, 16
          %s625 = scalar_lea.hbm %s4, %s624
          %s627 = sshll.u32 %s620, 4
          %s628 = int_to_ptr.vmem [resolvable:$true] %s627
          %630 = dma.hbm_to_vmem [thread:$0]  %s625, 16, %s628, %s618
        $region72: #{tpu_custom_call.1} parent=55 // pred_fallthru
          _
        // Predicated region
        $region73: #{tpu_custom_call.1} parent=55 // pred_check
          %p631 = pneg %p175
        $region74: #{tpu_custom_call.1} parent=55 // pred_check_branch
          %633 = sbr.rel (%p631) target = $region76
        $region75: #{tpu_custom_call.1} parent=55 // pred_region
          %s634 = sld [smem:[#allocation3 + %s49]]
          %p635 = scmp.lt.s32.totalorder %s634, 63
          %s636 = scalar_select %p635, %s634, 63
          %s637 = scalar_lea.vmem %s5, %s636
          %s638 = sld [smem:[#allocation3 + %s49]]
        $region76: #{tpu_custom_call.1} parent=55 // pred_fallthru
          _
      $region56: #{tpu_custom_call.1} parent=5 // pred_fallthru
        _
      %p639 = scmp.le.s32.totalorder 1, %s49
      %p640 = scmp.lt.s32.totalorder %s49, 3
      %p641 = pnand %p639, %p640
      %p642 = pneg %p641
      // Predicated region
      $region77: #{tpu_custom_call.1} parent=5 // pred_check
        _
      $region78: #{tpu_custom_call.1} parent=5 // pred_check_branch
        %644 = sbr.rel (%p641) target = $region80
      $region79: #{tpu_custom_call.1} parent=5 // pred_region
        %s645 = ssub.s32 %s49, 1
        %s646 = sand.u32 %s88, 1
        %s647 = scalar_lea.sflag [#allocation5], %s646
        %s648 = sand.u32 %s88, 1
        %s649 = scalar_lea.vmem [#allocation4], %s648
        // Predicated region
        $region81: #{tpu_custom_call.1} parent=79 // pred_check
          %p650 = pneg %p101
        $region82: #{tpu_custom_call.1} parent=79 // pred_check_branch
          %652 = sbr.rel (%p650) target = $region84
        $region83: #{tpu_custom_call.1} parent=79 // pred_region
          %653 = dma.done %s647, 16
        $region84: #{tpu_custom_call.1} parent=79 // pred_fallthru
          _
        %s654 = sand.u32 %s54, 1
        %s655 = scalar_lea.sflag [#allocation8], %s654
        %s656 = sand.u32 %s114, 1
        %s657 = scalar_lea.vmem [#allocation7], %s656
        // Predicated region
        $region85: #{tpu_custom_call.1} parent=79 // pred_check
          %p658 = pneg %p127
        $region86: #{tpu_custom_call.1} parent=79 // pred_check_branch
          %660 = sbr.rel (%p658) target = $region88
        $region87: #{tpu_custom_call.1} parent=79 // pred_region
          %661 = dma.done %s655, 16
        $region88: #{tpu_custom_call.1} parent=79 // pred_fallthru
          _
        %s662 = sand.u32 %s54, 1
        %s663 = scalar_lea.sflag [#allocation8], %s662
        %s664 = sand.u32 %s140, 1
        %s665 = scalar_lea.vmem [#allocation9], %s664
        // Predicated region
        $region89: #{tpu_custom_call.1} parent=79 // pred_check
          %p666 = pneg %p153
        $region90: #{tpu_custom_call.1} parent=79 // pred_check_branch
          %668 = sbr.rel (%p666) target = $region92
        $region91: #{tpu_custom_call.1} parent=79 // pred_region
          %669 = dma.done %s663, 16
        $region92: #{tpu_custom_call.1} parent=79 // pred_fallthru
          _
        // Predicated region
        $region93: #{tpu_custom_call.1} parent=79 // pred_check
          %p670 = pneg %p265
        $region94: #{tpu_custom_call.1} parent=79 // pred_check_branch
          %672 = sbr.rel (%p670) target = $region96
        $region95: #{tpu_custom_call.1} parent=79 // pred_region
          %673 = dma.done [#allocation11], 64
        $region96: #{tpu_custom_call.1} parent=79 // pred_fallthru
          _
        // Predicated region
        $region97: #{tpu_custom_call.1} parent=79 // pred_check
          %p674 = pneg %p286
        $region98: #{tpu_custom_call.1} parent=79 // pred_check_branch
          %676 = sbr.rel (%p674) target = $region100
        $region99: #{tpu_custom_call.1} parent=79 // pred_region
          %677 = dma.done [#allocation11], 128
        $region100: #{tpu_custom_call.1} parent=79 // pred_fallthru
          _
        // Predicated region
        $region101: #{tpu_custom_call.1} parent=79 // pred_check
          %p678 = pneg %p328
        $region102: #{tpu_custom_call.1} parent=79 // pred_check_branch
          %680 = sbr.rel (%p678) target = $region104
        $region103: #{tpu_custom_call.1} parent=79 // pred_region
          %681 = dma.done [#allocation14], 1024
        $region104: #{tpu_custom_call.1} parent=79 // pred_fallthru
          _
        %p682 = scmp.lt.s32.totalorder %s54, 1
        %s683 = scalar_select %p682, %s54, 1
        %s684 = smul.addr %s683, 8
        %s685 = smul.addr %s684, 4
        %s686 = scalar_lea.vmem %s1, %s685
        %p687 = pneg %p75
        %p688 = pneg %p72
        %s689 = sand.u32 %s88, 1
        %s690 = scalar_lea.sflag [#allocation5], %s689
        %s691 = sand.u32 %s88, 1
        %s692 = scalar_lea.vmem [#allocation4], %s691
        %p693 = pneg %p101
        %p694 = pneg %p98
        %s695 = sand.u32 %s54, 1
        %s696 = scalar_lea.sflag [#allocation8], %s695
        %s697 = sand.u32 %s114, 1
        %s698 = scalar_lea.vmem [#allocation7], %s697
        %p699 = pneg %p127
        %p700 = pneg %p124
        %s701 = sand.u32 %s54, 1
        %s702 = scalar_lea.sflag [#allocation8], %s701
        %s703 = sand.u32 %s140, 1
        %s704 = scalar_lea.vmem [#allocation9], %s703
        %p705 = pneg %p153
        %p706 = pneg %p150
        %s707 = sld [smem:[#allocation3 + %s54]]
        %p708 = scmp.lt.s32.totalorder %s707, 63
        %s709 = scalar_select %p708, %s707, 63
        %s710 = scalar_lea.vmem %s5, %s709
        %p711 = pneg %p181
        %p712 = pneg %p178
        %p713 = pneg %p202
        %p714 = pneg %p199
        %p715 = pneg %p223
        %p716 = pneg %p220
        %p717 = pneg %p244
        %p718 = pneg %p241
        %p719 = pneg %p265
        %p720 = pneg %p262
        %p721 = pneg %p286
        %p722 = pneg %p283
        %p723 = pneg %p307
        %p724 = pneg %p304
        %p725 = pneg %p328
        %p726 = pneg %p325
        %p727 = pneg %p349
        %p728 = pneg %p346
        %p729 = pneg %p370
        %p730 = pneg %p367
        %p731 = pneg %p391
        %p732 = pneg %p388
        %p733 = pneg %p417
        %p734 = pneg %p414
        %s735 = sand.u32 %s404, 1
        %s736 = scalar_lea.sflag [#allocation6], %s735
        %s737 = sand.u32 %s404, 1
        %s738 = scalar_lea.vmem [#allocation15], %s737
        %p739 = pneg %p443
        %p740 = pneg %p440
        %s741 = sand.u32 %s54, 1
        %s742 = scalar_lea.sflag [#allocation17], %s741
        %s743 = sand.u32 %s430, 1
        %s744 = scalar_lea.vmem [#allocation16], %s743
        %p745 = pneg %p469
        %p746 = pneg %p466
        %s747 = sand.u32 %s54, 1
        %s748 = scalar_lea.sflag [#allocation17], %s747
        %s749 = sand.u32 %s456, 1
        %s750 = scalar_lea.vmem [#allocation18], %s749
        %p751 = pneg %p495
        %p752 = pneg %p492
        %s753 = sand.u32 %s482, 1
        %s754 = scalar_lea.sflag [#allocation20], %s753
        %s755 = sand.u32 %s482, 1
        %s756 = scalar_lea.vmem [#allocation19], %s755
        %p757 = scmp.lt.s32.totalorder %s54, 1
        %s758 = scalar_select %p757, %s54, 1
        %s759 = smul.addr %s758, 8
        %s760 = smul.addr %s759, 4
        %s761 = scalar_lea.vmem %s1, %s760
        %s762 = sld [smem:[#allocation3 + %s54]]
        %p763 = scmp.lt.s32.totalorder %s762, 63
        %s764 = scalar_select %p763, %s762, 63
        %s765 = scalar_lea.vmem %s5, %s764
        %s766 = sld [smem:[#allocation3 + %s54]]
        %v768 = vld [vmem:[%s761] sm:$0xf]
        %v769 = vld [vmem:[%s761 + $0x4] sm:$0xf]
        %v770 = vld [vmem:[%s761 + $0x8] sm:$0xf]
        %v771 = vld [vmem:[%s761 + $0xc] sm:$0xf]
        %v772 = vld [vmem:[%s761 + $0x10] sm:$0xf]
        %v773 = vld [vmem:[%s761 + $0x14] sm:$0xf]
        %v774 = vld [vmem:[%s761 + $0x18] sm:$0xf]
        %v775 = vld [vmem:[%s761 + $0x1c] sm:$0xf]
        %v776 = vunpack.c.l.bf16 %v768
        %v777 = vunpack.c.l.bf16 %v769
        %v778 = vunpack.c.l.bf16 %v770
        %v779 = vunpack.c.l.bf16 %v771
        %v780 = vunpack.c.l.bf16 %v772
        %v781 = vunpack.c.l.bf16 %v773
        %v782 = vunpack.c.l.bf16 %v774
        %v783 = vunpack.c.l.bf16 %v775
        %vm784 = vcmask 261120
        %v785 = vsel %vm784, %v776, 0.0
        %v786 = vsel %vm784, %v777, 0.0
        %v787 = vadd.f32 %v785, %v786
        %v788 = vsel %vm784, %v778, 0.0
        %v789 = vadd.f32 %v787, %v788
        %v790 = vsel %vm784, %v779, 0.0
        %v791 = vadd.f32 %v789, %v790
        %v792 = vsel %vm784, %v780, 0.0
        %v793 = vadd.f32 %v791, %v792
        %v794 = vsel %vm784, %v781, 0.0
        %v795 = vadd.f32 %v793, %v794
        %v796 = vsel %vm784, %v782, 0.0
        %v797 = vadd.f32 %v795, %v796
        %v798 = vsel %vm784, %v783, 0.0
        %v799 = vadd.f32 %v797, %v798
        %v800 = vrot.slane %v799, 4
        %v801 = vadd.f32 %v799, %v800
        %v802 = vrot.slane %v801, 2
        %v803 = vadd.f32 %v801, %v802
        %v804 = vrot.slane %v803, 1
        %v805 = vadd.f32 %v803, %v804
        %v806 = vrcp.pop 64.0
        %v807 = vmul.f32 %v805, %v806
        %v808 = vld [vmem:[%s649] sm:$0x1]
        %v809 = vadd.f32 %v807, %v808
        %v810 = vld [vmem:[%s765] sm:$0x1]
        %v811 = vpack.c.bf16 %v809, %v809
        %v812 = vld [vmem:[%s657] sm:$0x1]
        %v813 = vpack.c.bf16 %v812, %v812
        %v814 = vld [vmem:[%s6] sm:$0xf]
        %v815 = vld [vmem:[%s6 + $0x4] sm:$0xf]
        %v816 = vld [vmem:[%s6 + $0x8] sm:$0xf]
        %v817 = vld [vmem:[%s6 + $0xc] sm:$0xf]
        %v818 = vld [vmem:[%s7] sm:$0xf]
        %v819 = vld [vmem:[%s7 + $0x4] sm:$0xf]
        %v820 = vld [vmem:[%s7 + $0x8] sm:$0xf]
        %v821 = vld [vmem:[%s7 + $0xc] sm:$0xf]
        %v826 = vunpack.c.l.b16 %v818
        %v827 = vunpack.c.l.b16 %v819
        %v828 = vunpack.c.l.b16 %v820
        %v829 = vunpack.c.l.b16 %v821
        %v830 = vpack.c.b16 %v827, %v826
        %v831 = vpack.c.b16 %v829, %v828
        %v835 = vsel %vm784, %v810, 0
        %837 = vmatprep.subr.bf16.mxu0 0
        %838 = vmatpush1.bf16.msra.mxu0 %v830
        %839 = vmatprep.subr.bf16.mxu0 0
        %840 = vmatpush1.bf16.msra.mxu0 %v831
        %841 = vmatprep.subr.bf16.mxu0 0
        %842 = vmatpush1.bf16.msra.mxu0 0
        %843 = vmatprep.subr.bf16.mxu0 0
        %844 = vmatpush1.bf16.msra.mxu0 0
        %845 = vmatprep.subr.bf16.mxu0 0
        %846 = vmatpush1.bf16.msra.mxu0 0
        %847 = vmatprep.subr.bf16.mxu0 0
        %848 = vmatpush1.bf16.msra.mxu0 0
        %849 = vmatprep.subr.bf16.mxu0 0
        %850 = vmatpush1.bf16.msra.mxu0 0
        %851 = vmatprep.subr.bf16.mxu0 0
        %852 = vmatpush1.bf16.msra.mxu0 0
        %853 = vmatprep.subr.bf16.mxu0 0
        %854 = vmatpush1.bf16.msra.mxu0 0
        %855 = vmatprep.subr.bf16.mxu0 0
        %856 = vmatpush1.bf16.msra.mxu0 0
        %857 = vmatprep.subr.bf16.mxu0 0
        %858 = vmatpush1.bf16.msra.mxu0 0
        %859 = vmatprep.subr.bf16.mxu0 0
        %860 = vmatpush1.bf16.msra.mxu0 0
        %861 = vmatprep.subr.bf16.mxu0 0
        %862 = vmatpush1.bf16.msra.mxu0 0
        %863 = vmatprep.subr.bf16.mxu0 0
        %864 = vmatpush1.bf16.msra.mxu0 0
        %865 = vmatprep.subr.bf16.mxu0 0
        %866 = vmatpush1.bf16.msra.mxu0 0
        %867 = vmatprep.subr.bf16.mxu0 0
        %868 = vmatpush1.bf16.msra.mxu0 0
        %869 = vmatprep.mubr.bf16.mxu0 0
        %870 = vmatmul.mubr.bf16.gmra.mrb[0].mxu0 %v835
        %v871 = vpop.f32.mrb[0].mxu0
        %v872 = vadd.f32 0.0, %v871
        %v873 = vpop.f32.mrb[0].mxu0
        %v874 = vpop.f32.mrb[0].mxu0
        %v875 = vpop.f32.mrb[0].mxu0
        %876 = vdwg.mxu0
        %v881 = vunpack.c.l.b16 %v814
        %v882 = vunpack.c.l.b16 %v815
        %v883 = vunpack.c.l.b16 %v816
        %v884 = vunpack.c.l.b16 %v817
        %v885 = vpack.c.b16 %v882, %v881
        %v886 = vpack.c.b16 %v884, %v883
        %v890 = vsel %vm784, %v811, 0
        %892 = vmatprep.subr.bf16.mxu0 0
        %893 = vmatpush1.bf16.msra.mxu0 %v885
        %894 = vmatprep.subr.bf16.mxu0 0
        %895 = vmatpush1.bf16.msra.mxu0 %v886
        %896 = vmatprep.subr.bf16.mxu0 0
        %897 = vmatpush1.bf16.msra.mxu0 0
        %898 = vmatprep.subr.bf16.mxu0 0
        %899 = vmatpush1.bf16.msra.mxu0 0
        %900 = vmatprep.subr.bf16.mxu0 0
        %901 = vmatpush1.bf16.msra.mxu0 0
        %902 = vmatprep.subr.bf16.mxu0 0
        %903 = vmatpush1.bf16.msra.mxu0 0
        %904 = vmatprep.subr.bf16.mxu0 0
        %905 = vmatpush1.bf16.msra.mxu0 0
        %906 = vmatprep.subr.bf16.mxu0 0
        %907 = vmatpush1.bf16.msra.mxu0 0
        %908 = vmatprep.subr.bf16.mxu0 0
        %909 = vmatpush1.bf16.msra.mxu0 0
        %910 = vmatprep.subr.bf16.mxu0 0
        %911 = vmatpush1.bf16.msra.mxu0 0
        %912 = vmatprep.subr.bf16.mxu0 0
        %913 = vmatpush1.bf16.msra.mxu0 0
        %914 = vmatprep.subr.bf16.mxu0 0
        %915 = vmatpush1.bf16.msra.mxu0 0
        %916 = vmatprep.subr.bf16.mxu0 0
        %917 = vmatpush1.bf16.msra.mxu0 0
        %918 = vmatprep.subr.bf16.mxu0 0
        %919 = vmatpush1.bf16.msra.mxu0 0
        %920 = vmatprep.subr.bf16.mxu0 0
        %921 = vmatpush1.bf16.msra.mxu0 0
        %922 = vmatprep.subr.bf16.mxu0 0
        %923 = vmatpush1.bf16.msra.mxu0 0
        %924 = vmatprep.mubr.bf16.mxu0 0
        %925 = vmatmul.mubr.bf16.gmra.mrb[0].mxu0 %v890
        %v926 = vpop.f32.mrb[0].mxu0
        %v927 = vadd.f32 %v872, %v926
        %v928 = vpop.f32.mrb[0].mxu0
        %v929 = vpop.f32.mrb[0].mxu0
        %v930 = vpop.f32.mrb[0].mxu0
        %931 = vdwg.mxu0
        %v932 = vld [vmem:[%s8] sm:$0xf]
        %v933 = vld [vmem:[%s8 + $0x4] sm:$0xf]
        %v934 = vld [vmem:[%s8 + $0x8] sm:$0xf]
        %v935 = vld [vmem:[%s8 + $0xc] sm:$0xf]
        %v940 = vunpack.c.l.b16 %v932
        %v941 = vunpack.c.l.b16 %v933
        %v942 = vunpack.c.l.b16 %v934
        %v943 = vunpack.c.l.b16 %v935
        %v944 = vpack.c.b16 %v941, %v940
        %v945 = vpack.c.b16 %v943, %v942
        %v949 = vsel %vm784, %v813, 0
        %951 = vmatprep.subr.bf16.mxu0 0
        %952 = vmatpush1.bf16.msra.mxu0 %v944
        %953 = vmatprep.subr.bf16.mxu0 0
        %954 = vmatpush1.bf16.msra.mxu0 %v945
        %955 = vmatprep.subr.bf16.mxu0 0
        %956 = vmatpush1.bf16.msra.mxu0 0
        %957 = vmatprep.subr.bf16.mxu0 0
        %958 = vmatpush1.bf16.msra.mxu0 0
        %959 = vmatprep.subr.bf16.mxu0 0
        %960 = vmatpush1.bf16.msra.mxu0 0
        %961 = vmatprep.subr.bf16.mxu0 0
        %962 = vmatpush1.bf16.msra.mxu0 0
        %963 = vmatprep.subr.bf16.mxu0 0
        %964 = vmatpush1.bf16.msra.mxu0 0
        %965 = vmatprep.subr.bf16.mxu0 0
        %966 = vmatpush1.bf16.msra.mxu0 0
        %967 = vmatprep.subr.bf16.mxu0 0
        %968 = vmatpush1.bf16.msra.mxu0 0
        %969 = vmatprep.subr.bf16.mxu0 0
        %970 = vmatpush1.bf16.msra.mxu0 0
        %971 = vmatprep.subr.bf16.mxu0 0
        %972 = vmatpush1.bf16.msra.mxu0 0
        %973 = vmatprep.subr.bf16.mxu0 0
        %974 = vmatpush1.bf16.msra.mxu0 0
        %975 = vmatprep.subr.bf16.mxu0 0
        %976 = vmatpush1.bf16.msra.mxu0 0
        %977 = vmatprep.subr.bf16.mxu0 0
        %978 = vmatpush1.bf16.msra.mxu0 0
        %979 = vmatprep.subr.bf16.mxu0 0
        %980 = vmatpush1.bf16.msra.mxu0 0
        %981 = vmatprep.subr.bf16.mxu0 0
        %982 = vmatpush1.bf16.msra.mxu0 0
        %983 = vmatprep.mubr.bf16.mxu0 0
        %984 = vmatmul.mubr.bf16.gmra.mrb[0].mxu0 %v949
        %v985 = vpop.f32.mrb[0].mxu0
        %v986 = vadd.f32 0.0, %v985
        %v987 = vpop.f32.mrb[0].mxu0
        %v988 = vpop.f32.mrb[0].mxu0
        %v989 = vpop.f32.mrb[0].mxu0
        %990 = vdwg.mxu0
        %v991 = vadd.f32 %v927, %v986
        %v992 = vld [vmem:[#allocation10] sm:$0x1]
        %v993 = vadd.f32 %v991, %v992
        %v994 = vxor.u32 %v993, 2147483648
        %v995 = vmul.f32 %v994, 1.442695
        %v996 = vpow.pop %v995
        %v997 = vadd.f32 %v996, 1.0
        %v998 = vrcp.pop %v997
        %v999 = vmul.f32 1.0, %v998
        %s1000 = scalar_lea.vmem %s6, 16
        %v1001 = vld [vmem:[%s1000] sm:$0xf]
        %v1002 = vld [vmem:[%s1000 + $0x4] sm:$0xf]
        %v1003 = vld [vmem:[%s1000 + $0x8] sm:$0xf]
        %v1004 = vld [vmem:[%s1000 + $0xc] sm:$0xf]
        %s1005 = scalar_lea.vmem %s7, 16
        %v1006 = vld [vmem:[%s1005] sm:$0xf]
        %v1007 = vld [vmem:[%s1005 + $0x4] sm:$0xf]
        %v1008 = vld [vmem:[%s1005 + $0x8] sm:$0xf]
        %v1009 = vld [vmem:[%s1005 + $0xc] sm:$0xf]
        %v1014 = vunpack.c.l.b16 %v1006
        %v1015 = vunpack.c.l.b16 %v1007
        %v1016 = vunpack.c.l.b16 %v1008
        %v1017 = vunpack.c.l.b16 %v1009
        %v1018 = vpack.c.b16 %v1015, %v1014
        %v1019 = vpack.c.b16 %v1017, %v1016
        %1022 = vmatprep.subr.bf16.mxu0 0
        %1023 = vmatpush1.bf16.msra.mxu0 %v1018
        %1024 = vmatprep.subr.bf16.mxu0 0
        %1025 = vmatpush1.bf16.msra.mxu0 %v1019
        %1026 = vmatprep.subr.bf16.mxu0 0
        %1027 = vmatpush1.bf16.msra.mxu0 0
        %1028 = vmatprep.subr.bf16.mxu0 0
        %1029 = vmatpush1.bf16.msra.mxu0 0
        %1030 = vmatprep.subr.bf16.mxu0 0
        %1031 = vmatpush1.bf16.msra.mxu0 0
        %1032 = vmatprep.subr.bf16.mxu0 0
        %1033 = vmatpush1.bf16.msra.mxu0 0
        %1034 = vmatprep.subr.bf16.mxu0 0
        %1035 = vmatpush1.bf16.msra.mxu0 0
        %1036 = vmatprep.subr.bf16.mxu0 0
        %1037 = vmatpush1.bf16.msra.mxu0 0
        %1038 = vmatprep.subr.bf16.mxu0 0
        %1039 = vmatpush1.bf16.msra.mxu0 0
        %1040 = vmatprep.subr.bf16.mxu0 0
        %1041 = vmatpush1.bf16.msra.mxu0 0
        %1042 = vmatprep.subr.bf16.mxu0 0
        %1043 = vmatpush1.bf16.msra.mxu0 0
        %1044 = vmatprep.subr.bf16.mxu0 0
        %1045 = vmatpush1.bf16.msra.mxu0 0
        %1046 = vmatprep.subr.bf16.mxu0 0
        %1047 = vmatpush1.bf16.msra.mxu0 0
        %1048 = vmatprep.subr.bf16.mxu0 0
        %1049 = vmatpush1.bf16.msra.mxu0 0
        %1050 = vmatprep.subr.bf16.mxu0 0
        %1051 = vmatpush1.bf16.msra.mxu0 0
        %1052 = vmatprep.subr.bf16.mxu0 0
        %1053 = vmatpush1.bf16.msra.mxu0 0
        %1054 = vmatprep.mubr.bf16.mxu0 0
        %1055 = vmatmul.mubr.bf16.gmra.mrb[0].mxu0 %v835
        %v1056 = vpop.f32.mrb[0].mxu0
        %v1057 = vadd.f32 0.0, %v1056
        %v1058 = vpop.f32.mrb[0].mxu0
        %v1059 = vpop.f32.mrb[0].mxu0
        %v1060 = vpop.f32.mrb[0].mxu0
        %1061 = vdwg.mxu0
        %v1066 = vunpack.c.l.b16 %v1001
        %v1067 = vunpack.c.l.b16 %v1002
        %v1068 = vunpack.c.l.b16 %v1003
        %v1069 = vunpack.c.l.b16 %v1004
        %v1070 = vpack.c.b16 %v1067, %v1066
        %v1071 = vpack.c.b16 %v1069, %v1068
        %1074 = vmatprep.subr.bf16.mxu0 0
        %1075 = vmatpush1.bf16.msra.mxu0 %v1070
        %1076 = vmatprep.subr.bf16.mxu0 0
        %1077 = vmatpush1.bf16.msra.mxu0 %v1071
        %1078 = vmatprep.subr.bf16.mxu0 0
        %1079 = vmatpush1.bf16.msra.mxu0 0
        %1080 = vmatprep.subr.bf16.mxu0 0
        %1081 = vmatpush1.bf16.msra.mxu0 0
        %1082 = vmatprep.subr.bf16.mxu0 0
        %1083 = vmatpush1.bf16.msra.mxu0 0
        %1084 = vmatprep.subr.bf16.mxu0 0
        %1085 = vmatpush1.bf16.msra.mxu0 0
        %1086 = vmatprep.subr.bf16.mxu0 0
        %1087 = vmatpush1.bf16.msra.mxu0 0
        %1088 = vmatprep.subr.bf16.mxu0 0
        %1089 = vmatpush1.bf16.msra.mxu0 0
        %1090 = vmatprep.subr.bf16.mxu0 0
        %1091 = vmatpush1.bf16.msra.mxu0 0
        %1092 = vmatprep.subr.bf16.mxu0 0
        %1093 = vmatpush1.bf16.msra.mxu0 0
        %1094 = vmatprep.subr.bf16.mxu0 0
        %1095 = vmatpush1.bf16.msra.mxu0 0
        %1096 = vmatprep.subr.bf16.mxu0 0
        %1097 = vmatpush1.bf16.msra.mxu0 0
        %1098 = vmatprep.subr.bf16.mxu0 0
        %1099 = vmatpush1.bf16.msra.mxu0 0
        %1100 = vmatprep.subr.bf16.mxu0 0
        %1101 = vmatpush1.bf16.msra.mxu0 0
        %1102 = vmatprep.subr.bf16.mxu0 0
        %1103 = vmatpush1.bf16.msra.mxu0 0
        %1104 = vmatprep.subr.bf16.mxu0 0
        %1105 = vmatpush1.bf16.msra.mxu0 0
        %1106 = vmatprep.mubr.bf16.mxu0 0
        %1107 = vmatmul.mubr.bf16.gmra.mrb[0].mxu0 %v890
        %v1108 = vpop.f32.mrb[0].mxu0
        %v1109 = vadd.f32 %v1057, %v1108
        %v1110 = vpop.f32.mrb[0].mxu0
        %v1111 = vpop.f32.mrb[0].mxu0
        %v1112 = vpop.f32.mrb[0].mxu0
        %1113 = vdwg.mxu0
        %s1114 = scalar_lea.vmem %s8, 16
        %v1115 = vld [vmem:[%s1114] sm:$0xf]
        %v1116 = vld [vmem:[%s1114 + $0x4] sm:$0xf]
        %v1117 = vld [vmem:[%s1114 + $0x8] sm:$0xf]
        %v1118 = vld [vmem:[%s1114 + $0xc] sm:$0xf]
        %v1123 = vunpack.c.l.b16 %v1115
        %v1124 = vunpack.c.l.b16 %v1116
        %v1125 = vunpack.c.l.b16 %v1117
        %v1126 = vunpack.c.l.b16 %v1118
        %v1127 = vpack.c.b16 %v1124, %v1123
        %v1128 = vpack.c.b16 %v1126, %v1125
        %1131 = vmatprep.subr.bf16.mxu0 0
        %1132 = vmatpush1.bf16.msra.mxu0 %v1127
        %1133 = vmatprep.subr.bf16.mxu0 0
        %1134 = vmatpush1.bf16.msra.mxu0 %v1128
        %1135 = vmatprep.subr.bf16.mxu0 0
        %1136 = vmatpush1.bf16.msra.mxu0 0
        %1137 = vmatprep.subr.bf16.mxu0 0
        %1138 = vmatpush1.bf16.msra.mxu0 0
        %1139 = vmatprep.subr.bf16.mxu0 0
        %1140 = vmatpush1.bf16.msra.mxu0 0
        %1141 = vmatprep.subr.bf16.mxu0 0
        %1142 = vmatpush1.bf16.msra.mxu0 0
        %1143 = vmatprep.subr.bf16.mxu0 0
        %1144 = vmatpush1.bf16.msra.mxu0 0
        %1145 = vmatprep.subr.bf16.mxu0 0
        %1146 = vmatpush1.bf16.msra.mxu0 0
        %1147 = vmatprep.subr.bf16.mxu0 0
        %1148 = vmatpush1.bf16.msra.mxu0 0
        %1149 = vmatprep.subr.bf16.mxu0 0
        %1150 = vmatpush1.bf16.msra.mxu0 0
        %1151 = vmatprep.subr.bf16.mxu0 0
        %1152 = vmatpush1.bf16.msra.mxu0 0
        %1153 = vmatprep.subr.bf16.mxu0 0
        %1154 = vmatpush1.bf16.msra.mxu0 0
        %1155 = vmatprep.subr.bf16.mxu0 0
        %1156 = vmatpush1.bf16.msra.mxu0 0
        %1157 = vmatprep.subr.bf16.mxu0 0
        %1158 = vmatpush1.bf16.msra.mxu0 0
        %1159 = vmatprep.subr.bf16.mxu0 0
        %1160 = vmatpush1.bf16.msra.mxu0 0
        %1161 = vmatprep.subr.bf16.mxu0 0
        %1162 = vmatpush1.bf16.msra.mxu0 0
        %1163 = vmatprep.mubr.bf16.mxu0 0
        %1164 = vmatmul.mubr.bf16.gmra.mrb[0].mxu0 %v949
        %v1165 = vpop.f32.mrb[0].mxu0
        %v1166 = vadd.f32 0.0, %v1165
        %v1167 = vpop.f32.mrb[0].mxu0
        %v1168 = vpop.f32.mrb[0].mxu0
        %v1169 = vpop.f32.mrb[0].mxu0
        %1170 = vdwg.mxu0
        %v1171 = vadd.f32 %v1109, %v1166
        %s1172 = scalar_lea.vmem [#allocation10], 1
        %v1173 = vld [vmem:[%s1172] sm:$0x1]
        %v1174 = vadd.f32 %v1171, %v1173
        %v1175 = vxor.u32 %v1174, 2147483648
        %v1176 = vmul.f32 %v1175, 1.442695
        %v1177 = vpow.pop %v1176
        %v1178 = vadd.f32 %v1177, 1.0
        %v1179 = vrcp.pop %v1178
        %v1180 = vmul.f32 1.0, %v1179
        %s1181 = scalar_lea.vmem %s6, 32
        %v1182 = vld [vmem:[%s1181] sm:$0xf]
        %v1183 = vld [vmem:[%s1181 + $0x4] sm:$0xf]
        %v1184 = vld [vmem:[%s1181 + $0x8] sm:$0xf]
        %v1185 = vld [vmem:[%s1181 + $0xc] sm:$0xf]
        %s1186 = scalar_lea.vmem %s7, 32
        %v1187 = vld [vmem:[%s1186] sm:$0xf]
        %v1188 = vld [vmem:[%s1186 + $0x4] sm:$0xf]
        %v1189 = vld [vmem:[%s1186 + $0x8] sm:$0xf]
        %v1190 = vld [vmem:[%s1186 + $0xc] sm:$0xf]
        %v1195 = vunpack.c.l.b16 %v1187
        %v1196 = vunpack.c.l.b16 %v1188
        %v1197 = vunpack.c.l.b16 %v1189
        %v1198 = vunpack.c.l.b16 %v1190
        %v1199 = vpack.c.b16 %v1196, %v1195
        %v1200 = vpack.c.b16 %v1198, %v1197
        %1203 = vmatprep.subr.bf16.mxu0 0
        %1204 = vmatpush1.bf16.msra.mxu0 %v1199
        %1205 = vmatprep.subr.bf16.mxu0 0
        %1206 = vmatpush1.bf16.msra.mxu0 %v1200
        %1207 = vmatprep.subr.bf16.mxu0 0
        %1208 = vmatpush1.bf16.msra.mxu0 0
        %1209 = vmatprep.subr.bf16.mxu0 0
        %1210 = vmatpush1.bf16.msra.mxu0 0
        %1211 = vmatprep.subr.bf16.mxu0 0
        %1212 = vmatpush1.bf16.msra.mxu0 0
        %1213 = vmatprep.subr.bf16.mxu0 0
        %1214 = vmatpush1.bf16.msra.mxu0 0
        %1215 = vmatprep.subr.bf16.mxu0 0
        %1216 = vmatpush1.bf16.msra.mxu0 0
        %1217 = vmatprep.subr.bf16.mxu0 0
        %1218 = vmatpush1.bf16.msra.mxu0 0
        %1219 = vmatprep.subr.bf16.mxu0 0
        %1220 = vmatpush1.bf16.msra.mxu0 0
        %1221 = vmatprep.subr.bf16.mxu0 0
        %1222 = vmatpush1.bf16.msra.mxu0 0
        %1223 = vmatprep.subr.bf16.mxu0 0
        %1224 = vmatpush1.bf16.msra.mxu0 0
        %1225 = vmatprep.subr.bf16.mxu0 0
        %1226 = vmatpush1.bf16.msra.mxu0 0
        %1227 = vmatprep.subr.bf16.mxu0 0
        %1228 = vmatpush1.bf16.msra.mxu0 0
        %1229 = vmatprep.subr.bf16.mxu0 0
        %1230 = vmatpush1.bf16.msra.mxu0 0
        %1231 = vmatprep.subr.bf16.mxu0 0
        %1232 = vmatpush1.bf16.msra.mxu0 0
        %1233 = vmatprep.subr.bf16.mxu0 0
        %1234 = vmatpush1.bf16.msra.mxu0 0
        %1235 = vmatprep.mubr.bf16.mxu0 0
        %1236 = vmatmul.mubr.bf16.gmra.mrb[0].mxu0 %v835
        %v1237 = vpop.f32.mrb[0].mxu0
        %v1238 = vadd.f32 0.0, %v1237
        %v1239 = vpop.f32.mrb[0].mxu0
        %v1240 = vpop.f32.mrb[0].mxu0
        %v1241 = vpop.f32.mrb[0].mxu0
        %1242 = vdwg.mxu0
        %v1247 = vunpack.c.l.b16 %v1182
        %v1248 = vunpack.c.l.b16 %v1183
        %v1249 = vunpack.c.l.b16 %v1184
        %v1250 = vunpack.c.l.b16 %v1185
        %v1251 = vpack.c.b16 %v1248, %v1247
        %v1252 = vpack.c.b16 %v1250, %v1249
        %1255 = vmatprep.subr.bf16.mxu0 0
        %1256 = vmatpush1.bf16.msra.mxu0 %v1251
        %1257 = vmatprep.subr.bf16.mxu0 0
        %1258 = vmatpush1.bf16.msra.mxu0 %v1252
        %1259 = vmatprep.subr.bf16.mxu0 0
        %1260 = vmatpush1.bf16.msra.mxu0 0
        %1261 = vmatprep.subr.bf16.mxu0 0
        %1262 = vmatpush1.bf16.msra.mxu0 0
        %1263 = vmatprep.subr.bf16.mxu0 0
        %1264 = vmatpush1.bf16.msra.mxu0 0
        %1265 = vmatprep.subr.bf16.mxu0 0
        %1266 = vmatpush1.bf16.msra.mxu0 0
        %1267 = vmatprep.subr.bf16.mxu0 0
        %1268 = vmatpush1.bf16.msra.mxu0 0
        %1269 = vmatprep.subr.bf16.mxu0 0
        %1270 = vmatpush1.bf16.msra.mxu0 0
        %1271 = vmatprep.subr.bf16.mxu0 0
        %1272 = vmatpush1.bf16.msra.mxu0 0
        %1273 = vmatprep.subr.bf16.mxu0 0
        %1274 = vmatpush1.bf16.msra.mxu0 0
        %1275 = vmatprep.subr.bf16.mxu0 0
        %1276 = vmatpush1.bf16.msra.mxu0 0
        %1277 = vmatprep.subr.bf16.mxu0 0
        %1278 = vmatpush1.bf16.msra.mxu0 0
        %1279 = vmatprep.subr.bf16.mxu0 0
        %1280 = vmatpush1.bf16.msra.mxu0 0
        %1281 = vmatprep.subr.bf16.mxu0 0
        %1282 = vmatpush1.bf16.msra.mxu0 0
        %1283 = vmatprep.subr.bf16.mxu0 0
        %1284 = vmatpush1.bf16.msra.mxu0 0
        %1285 = vmatprep.subr.bf16.mxu0 0
        %1286 = vmatpush1.bf16.msra.mxu0 0
        %1287 = vmatprep.mubr.bf16.mxu0 0
        %1288 = vmatmul.mubr.bf16.gmra.mrb[0].mxu0 %v890
        %v1289 = vpop.f32.mrb[0].mxu0
        %v1290 = vadd.f32 %v1238, %v1289
        %v1291 = vpop.f32.mrb[0].mxu0
        %v1292 = vpop.f32.mrb[0].mxu0
        %v1293 = vpop.f32.mrb[0].mxu0
        %1294 = vdwg.mxu0
        %s1295 = scalar_lea.vmem %s8, 32
        %v1296 = vld [vmem:[%s1295] sm:$0xf]
        %v1297 = vld [vmem:[%s1295 + $0x4] sm:$0xf]
        %v1298 = vld [vmem:[%s1295 + $0x8] sm:$0xf]
        %v1299 = vld [vmem:[%s1295 + $0xc] sm:$0xf]
        %v1304 = vunpack.c.l.b16 %v1296
        %v1305 = vunpack.c.l.b16 %v1297
        %v1306 = vunpack.c.l.b16 %v1298
        %v1307 = vunpack.c.l.b16 %v1299
        %v1308 = vpack.c.b16 %v1305, %v1304
        %v1309 = vpack.c.b16 %v1307, %v1306
        %1312 = vmatprep.subr.bf16.mxu0 0
        %1313 = vmatpush1.bf16.msra.mxu0 %v1308
        %1314 = vmatprep.subr.bf16.mxu0 0
        %1315 = vmatpush1.bf16.msra.mxu0 %v1309
        %1316 = vmatprep.subr.bf16.mxu0 0
        %1317 = vmatpush1.bf16.msra.mxu0 0
        %1318 = vmatprep.subr.bf16.mxu0 0
        %1319 = vmatpush1.bf16.msra.mxu0 0
        %1320 = vmatprep.subr.bf16.mxu0 0
        %1321 = vmatpush1.bf16.msra.mxu0 0
        %1322 = vmatprep.subr.bf16.mxu0 0
        %1323 = vmatpush1.bf16.msra.mxu0 0
        %1324 = vmatprep.subr.bf16.mxu0 0
        %1325 = vmatpush1.bf16.msra.mxu0 0
        %1326 = vmatprep.subr.bf16.mxu0 0
        %1327 = vmatpush1.bf16.msra.mxu0 0
        %1328 = vmatprep.subr.bf16.mxu0 0
        %1329 = vmatpush1.bf16.msra.mxu0 0
        %1330 = vmatprep.subr.bf16.mxu0 0
        %1331 = vmatpush1.bf16.msra.mxu0 0
        %1332 = vmatprep.subr.bf16.mxu0 0
        %1333 = vmatpush1.bf16.msra.mxu0 0
        %1334 = vmatprep.subr.bf16.mxu0 0
        %1335 = vmatpush1.bf16.msra.mxu0 0
        %1336 = vmatprep.subr.bf16.mxu0 0
        %1337 = vmatpush1.bf16.msra.mxu0 0
        %1338 = vmatprep.subr.bf16.mxu0 0
        %1339 = vmatpush1.bf16.msra.mxu0 0
        %1340 = vmatprep.subr.bf16.mxu0 0
        %1341 = vmatpush1.bf16.msra.mxu0 0
        %1342 = vmatprep.subr.bf16.mxu0 0
        %1343 = vmatpush1.bf16.msra.mxu0 0
        %1344 = vmatprep.mubr.bf16.mxu0 0
        %1345 = vmatmul.mubr.bf16.gmra.mrb[0].mxu0 %v949
        %v1346 = vpop.f32.mrb[0].mxu0
        %v1347 = vadd.f32 0.0, %v1346
        %v1348 = vpop.f32.mrb[0].mxu0
        %v1349 = vpop.f32.mrb[0].mxu0
        %v1350 = vpop.f32.mrb[0].mxu0
        %1351 = vdwg.mxu0
        %v1352 = vadd.f32 %v1290, %v1347
        %s1353 = scalar_lea.vmem [#allocation10], 2
        %v1354 = vld [vmem:[%s1353] sm:$0x1]
        %v1355 = vadd.f32 %v1352, %v1354
        %v1356 = vtanh.pop %v1355
        %s1357 = scalar_lea.vmem %s6, 48
        %v1358 = vld [vmem:[%s1357] sm:$0xf]
        %v1359 = vld [vmem:[%s1357 + $0x4] sm:$0xf]
        %v1360 = vld [vmem:[%s1357 + $0x8] sm:$0xf]
        %v1361 = vld [vmem:[%s1357 + $0xc] sm:$0xf]
        %s1362 = scalar_lea.vmem %s7, 48
        %v1363 = vld [vmem:[%s1362] sm:$0xf]
        %v1364 = vld [vmem:[%s1362 + $0x4] sm:$0xf]
        %v1365 = vld [vmem:[%s1362 + $0x8] sm:$0xf]
        %v1366 = vld [vmem:[%s1362 + $0xc] sm:$0xf]
        %v1371 = vunpack.c.l.b16 %v1363
        %v1372 = vunpack.c.l.b16 %v1364
        %v1373 = vunpack.c.l.b16 %v1365
        %v1374 = vunpack.c.l.b16 %v1366
        %v1375 = vpack.c.b16 %v1372, %v1371
        %v1376 = vpack.c.b16 %v1374, %v1373
        %1379 = vmatprep.subr.bf16.mxu0 0
        %1380 = vmatpush1.bf16.msra.mxu0 %v1375
        %1381 = vmatprep.subr.bf16.mxu0 0
        %1382 = vmatpush1.bf16.msra.mxu0 %v1376
        %1383 = vmatprep.subr.bf16.mxu0 0
        %1384 = vmatpush1.bf16.msra.mxu0 0
        %1385 = vmatprep.subr.bf16.mxu0 0
        %1386 = vmatpush1.bf16.msra.mxu0 0
        %1387 = vmatprep.subr.bf16.mxu0 0
        %1388 = vmatpush1.bf16.msra.mxu0 0
        %1389 = vmatprep.subr.bf16.mxu0 0
        %1390 = vmatpush1.bf16.msra.mxu0 0
        %1391 = vmatprep.subr.bf16.mxu0 0
        %1392 = vmatpush1.bf16.msra.mxu0 0
        %1393 = vmatprep.subr.bf16.mxu0 0
        %1394 = vmatpush1.bf16.msra.mxu0 0
        %1395 = vmatprep.subr.bf16.mxu0 0
        %1396 = vmatpush1.bf16.msra.mxu0 0
        %1397 = vmatprep.subr.bf16.mxu0 0
        %1398 = vmatpush1.bf16.msra.mxu0 0
        %1399 = vmatprep.subr.bf16.mxu0 0
        %1400 = vmatpush1.bf16.msra.mxu0 0
        %1401 = vmatprep.subr.bf16.mxu0 0
        %1402 = vmatpush1.bf16.msra.mxu0 0
        %1403 = vmatprep.subr.bf16.mxu0 0
        %1404 = vmatpush1.bf16.msra.mxu0 0
        %1405 = vmatprep.subr.bf16.mxu0 0
        %1406 = vmatpush1.bf16.msra.mxu0 0
        %1407 = vmatprep.subr.bf16.mxu0 0
        %1408 = vmatpush1.bf16.msra.mxu0 0
        %1409 = vmatprep.subr.bf16.mxu0 0
        %1410 = vmatpush1.bf16.msra.mxu0 0
        %1411 = vmatprep.mubr.bf16.mxu0 0
        %1412 = vmatmul.mubr.bf16.gmra.mrb[0].mxu0 %v835
        %v1413 = vpop.f32.mrb[0].mxu0
        %v1414 = vadd.f32 0.0, %v1413
        %v1415 = vpop.f32.mrb[0].mxu0
        %v1416 = vpop.f32.mrb[0].mxu0
        %v1417 = vpop.f32.mrb[0].mxu0
        %1418 = vdwg.mxu0
        %v1423 = vunpack.c.l.b16 %v1358
        %v1424 = vunpack.c.l.b16 %v1359
        %v1425 = vunpack.c.l.b16 %v1360
        %v1426 = vunpack.c.l.b16 %v1361
        %v1427 = vpack.c.b16 %v1424, %v1423
        %v1428 = vpack.c.b16 %v1426, %v1425
        %1431 = vmatprep.subr.bf16.mxu0 0
        %1432 = vmatpush1.bf16.msra.mxu0 %v1427
        %1433 = vmatprep.subr.bf16.mxu0 0
        %1434 = vmatpush1.bf16.msra.mxu0 %v1428
        %1435 = vmatprep.subr.bf16.mxu0 0
        %1436 = vmatpush1.bf16.msra.mxu0 0
        %1437 = vmatprep.subr.bf16.mxu0 0
        %1438 = vmatpush1.bf16.msra.mxu0 0
        %1439 = vmatprep.subr.bf16.mxu0 0
        %1440 = vmatpush1.bf16.msra.mxu0 0
        %1441 = vmatprep.subr.bf16.mxu0 0
        %1442 = vmatpush1.bf16.msra.mxu0 0
        %1443 = vmatprep.subr.bf16.mxu0 0
        %1444 = vmatpush1.bf16.msra.mxu0 0
        %1445 = vmatprep.subr.bf16.mxu0 0
        %1446 = vmatpush1.bf16.msra.mxu0 0
        %1447 = vmatprep.subr.bf16.mxu0 0
        %1448 = vmatpush1.bf16.msra.mxu0 0
        %1449 = vmatprep.subr.bf16.mxu0 0
        %1450 = vmatpush1.bf16.msra.mxu0 0
        %1451 = vmatprep.subr.bf16.mxu0 0
        %1452 = vmatpush1.bf16.msra.mxu0 0
        %1453 = vmatprep.subr.bf16.mxu0 0
        %1454 = vmatpush1.bf16.msra.mxu0 0
        %1455 = vmatprep.subr.bf16.mxu0 0
        %1456 = vmatpush1.bf16.msra.mxu0 0
        %1457 = vmatprep.subr.bf16.mxu0 0
        %1458 = vmatpush1.bf16.msra.mxu0 0
        %1459 = vmatprep.subr.bf16.mxu0 0
        %1460 = vmatpush1.bf16.msra.mxu0 0
        %1461 = vmatprep.subr.bf16.mxu0 0
        %1462 = vmatpush1.bf16.msra.mxu0 0
        %1463 = vmatprep.mubr.bf16.mxu0 0
        %1464 = vmatmul.mubr.bf16.gmra.mrb[0].mxu0 %v890
        %v1465 = vpop.f32.mrb[0].mxu0
        %v1466 = vadd.f32 %v1414, %v1465
        %v1467 = vpop.f32.mrb[0].mxu0
        %v1468 = vpop.f32.mrb[0].mxu0
        %v1469 = vpop.f32.mrb[0].mxu0
        %1470 = vdwg.mxu0
        %s1471 = scalar_lea.vmem %s8, 48
        %v1472 = vld [vmem:[%s1471] sm:$0xf]
        %v1473 = vld [vmem:[%s1471 + $0x4] sm:$0xf]
        %v1474 = vld [vmem:[%s1471 + $0x8] sm:$0xf]
        %v1475 = vld [vmem:[%s1471 + $0xc] sm:$0xf]
        %v1480 = vunpack.c.l.b16 %v1472
        %v1481 = vunpack.c.l.b16 %v1473
        %v1482 = vunpack.c.l.b16 %v1474
        %v1483 = vunpack.c.l.b16 %v1475
        %v1484 = vpack.c.b16 %v1481, %v1480
        %v1485 = vpack.c.b16 %v1483, %v1482
        %1488 = vmatprep.subr.bf16.mxu0 0
        %1489 = vmatpush1.bf16.msra.mxu0 %v1484
        %1490 = vmatprep.subr.bf16.mxu0 0
        %1491 = vmatpush1.bf16.msra.mxu0 %v1485
        %1492 = vmatprep.subr.bf16.mxu0 0
        %1493 = vmatpush1.bf16.msra.mxu0 0
        %1494 = vmatprep.subr.bf16.mxu0 0
        %1495 = vmatpush1.bf16.msra.mxu0 0
        %1496 = vmatprep.subr.bf16.mxu0 0
        %1497 = vmatpush1.bf16.msra.mxu0 0
        %1498 = vmatprep.subr.bf16.mxu0 0
        %1499 = vmatpush1.bf16.msra.mxu0 0
        %1500 = vmatprep.subr.bf16.mxu0 0
        %1501 = vmatpush1.bf16.msra.mxu0 0
        %1502 = vmatprep.subr.bf16.mxu0 0
        %1503 = vmatpush1.bf16.msra.mxu0 0
        %1504 = vmatprep.subr.bf16.mxu0 0
        %1505 = vmatpush1.bf16.msra.mxu0 0
        %1506 = vmatprep.subr.bf16.mxu0 0
        %1507 = vmatpush1.bf16.msra.mxu0 0
        %1508 = vmatprep.subr.bf16.mxu0 0
        %1509 = vmatpush1.bf16.msra.mxu0 0
        %1510 = vmatprep.subr.bf16.mxu0 0
        %1511 = vmatpush1.bf16.msra.mxu0 0
        %1512 = vmatprep.subr.bf16.mxu0 0
        %1513 = vmatpush1.bf16.msra.mxu0 0
        %1514 = vmatprep.subr.bf16.mxu0 0
        %1515 = vmatpush1.bf16.msra.mxu0 0
        %1516 = vmatprep.subr.bf16.mxu0 0
        %1517 = vmatpush1.bf16.msra.mxu0 0
        %1518 = vmatprep.subr.bf16.mxu0 0
        %1519 = vmatpush1.bf16.msra.mxu0 0
        %1520 = vmatprep.mubr.bf16.mxu0 0
        %1521 = vmatmul.mubr.bf16.gmra.mrb[0].mxu0 %v949
        %v1522 = vpop.f32.mrb[0].mxu0
        %v1523 = vadd.f32 0.0, %v1522
        %v1524 = vpop.f32.mrb[0].mxu0
        %v1525 = vpop.f32.mrb[0].mxu0
        %v1526 = vpop.f32.mrb[0].mxu0
        %1527 = vdwg.mxu0
        %v1528 = vadd.f32 %v1466, %v1523
        %s1529 = scalar_lea.vmem [#allocation10], 3
        %v1530 = vld [vmem:[%s1529] sm:$0x1]
        %v1531 = vadd.f32 %v1528, %v1530
        %v1532 = vxor.u32 %v1531, 2147483648
        %v1533 = vmul.f32 %v1532, 1.442695
        %v1534 = vpow.pop %v1533
        %v1535 = vadd.f32 %v1534, 1.0
        %v1536 = vrcp.pop %v1535
        %v1537 = vmul.f32 1.0, %v1536
        %v1538 = vld [vmem:[%s665] sm:$0x1]
        %v1539 = vmul.f32 %v1180, %v1538
        %v1540 = vmul.f32 %v999, %v1356
        %v1541 = vadd.f32 %v1539, %v1540
        %v1542 = vtanh.pop %v1541
        %v1543 = vmul.f32 %v1537, %v1542
        %vm1544 = vcmask 253952
        %1545 = vst.msk [vmem:[%s750] sm:$0x1] %vm1544, %v1543
        %1546 = vst.msk [vmem:[%s756] sm:$0x1] %vm1544, %v1541
        %v1547 = vld [vmem:[#allocation12] sm:$0xff]
        %v1548 = vlaneseq
        %v1549 = vshrl.u32 %v1548, 7
        %v1550 = vsub.s32 0, %v1549
        %v1551 = vrot.slane %v1543, %v1550
        %v1552 = vmul.f32 %v1551, %v1547
        %v1553 = vpack.c.bf16 %v1552, %v1552
        %v1562 = vunpack.c.l.b16 %v768
        %v1563 = vunpack.c.l.b16 %v769
        %v1564 = vunpack.c.l.b16 %v770
        %v1565 = vunpack.c.l.b16 %v771
        %v1566 = vunpack.c.l.b16 %v772
        %v1567 = vunpack.c.l.b16 %v773
        %v1568 = vunpack.c.l.b16 %v774
        %v1569 = vunpack.c.l.b16 %v775
        %v1570 = vpack.c.b16 %v1563, %v1562
        %v1571 = vpack.c.b16 %v1565, %v1564
        %v1572 = vpack.c.b16 %v1567, %v1566
        %v1573 = vpack.c.b16 %v1569, %v1568
        %v1575 = vsel %vm784, %v1570, 0
        %v1578 = vsel %vm784, %v1571, 0
        %v1581 = vsel %vm784, %v1572, 0
        %v1584 = vsel %vm784, %v1573, 0
        %v1587 = vsel %vm784, %v1553, 0
        %1589 = vmatprep.subr.bf16.mxu0 0
        %1590 = vmatpush1.bf16.xpose.msra.mxu0 %v1587
        %1591 = vmatprep.subr.bf16.mxu0 0
        %1592 = vmatpush1.bf16.xpose.msra.mxu0 0
        %1593 = vmatprep.subr.bf16.mxu0 0
        %1594 = vmatpush1.bf16.xpose.msra.mxu0 0
        %1595 = vmatprep.subr.bf16.mxu0 0
        %1596 = vmatpush1.bf16.xpose.msra.mxu0 0
        %1597 = vmatprep.subr.bf16.mxu0 0
        %1598 = vmatpush1.bf16.xpose.msra.mxu0 0
        %1599 = vmatprep.subr.bf16.mxu0 0
        %1600 = vmatpush1.bf16.xpose.msra.mxu0 0
        %1601 = vmatprep.subr.bf16.mxu0 0
        %1602 = vmatpush1.bf16.xpose.msra.mxu0 0
        %1603 = vmatprep.subr.bf16.mxu0 0
        %1604 = vmatpush1.bf16.xpose.msra.mxu0 0
        %1605 = vmatprep.subr.bf16.mxu0 0
        %1606 = vmatpush1.bf16.xpose.msra.mxu0 0
        %1607 = vmatprep.subr.bf16.mxu0 0
        %1608 = vmatpush1.bf16.xpose.msra.mxu0 0
        %1609 = vmatprep.subr.bf16.mxu0 0
        %1610 = vmatpush1.bf16.xpose.msra.mxu0 0
        %1611 = vmatprep.subr.bf16.mxu0 0
        %1612 = vmatpush1.bf16.xpose.msra.mxu0 0
        %1613 = vmatprep.subr.bf16.mxu0 0
        %1614 = vmatpush1.bf16.xpose.msra.mxu0 0
        %1615 = vmatprep.subr.bf16.mxu0 0
        %1616 = vmatpush1.bf16.xpose.msra.mxu0 0
        %1617 = vmatprep.subr.bf16.mxu0 0
        %1618 = vmatpush1.bf16.xpose.msra.mxu0 0
        %1619 = vmatprep.subr.bf16.mxu0 0
        %1620 = vmatpush1.bf16.xpose.msra.mxu0 0
        %1621 = vmatprep.mubr.bf16.mxu0 0
        %1622 = vmatmul.mubr.bf16.gmra.mrb[0].mxu0 %v1575
        %v1623 = vpop.f32.mrb[0].mxu0
        %v1624 = vadd.f32 0.0, %v1623
        %v1625 = vpop.f32.mrb[0].mxu0
        %v1626 = vpop.f32.mrb[0].mxu0
        %v1627 = vadd.f32 0.0, %v1626
        %v1628 = vpop.f32.mrb[0].mxu0
        %1629 = vmatprep.mubr.bf16.mxu0 0
        %1630 = vmatmul.mubr.bf16.gmra.mrb[0].mxu0 %v1578
        %v1631 = vpop.f32.mrb[0].mxu0
        %v1632 = vadd.f32 0.0, %v1631
        %v1633 = vpop.f32.mrb[0].mxu0
        %v1634 = vpop.f32.mrb[0].mxu0
        %v1635 = vadd.f32 0.0, %v1634
        %v1636 = vpop.f32.mrb[0].mxu0
        %1637 = vmatprep.mubr.bf16.mxu0 0
        %1638 = vmatmul.mubr.bf16.gmra.mrb[0].mxu0 %v1581
        %v1639 = vpop.f32.mrb[0].mxu0
        %v1640 = vadd.f32 0.0, %v1639
        %v1641 = vpop.f32.mrb[0].mxu0
        %v1642 = vpop.f32.mrb[0].mxu0
        %v1643 = vadd.f32 0.0, %v1642
        %v1644 = vpop.f32.mrb[0].mxu0
        %1645 = vmatprep.mubr.bf16.mxu0 0
        %1646 = vmatmul.mubr.bf16.gmra.mrb[0].mxu0 %v1584
        %v1647 = vpop.f32.mrb[0].mxu0
        %v1648 = vadd.f32 0.0, %v1647
        %v1649 = vpop.f32.mrb[0].mxu0
        %v1650 = vpop.f32.mrb[0].mxu0
        %v1651 = vadd.f32 0.0, %v1650
        %v1652 = vpop.f32.mrb[0].mxu0
        %1653 = vdwg.mxu0
        %vm1654 = vcmask 64512
        %v1655 = vsel %vm1654, %v1624, -inf
        %v1656 = vsel %vm1654, %v1627, -inf
        %v1657 = vsel %vm1654, %v1632, -inf
        %v1658 = vsel %vm1654, %v1635, -inf
        %v1659 = vsel %vm1654, %v1640, -inf
        %v1660 = vmax.f32 %v1655, %v1659
        %v1661 = vsel %vm1654, %v1643, -inf
        %v1662 = vmax.f32 %v1656, %v1661
        %v1663 = vsel %vm1654, %v1648, -inf
        %v1664 = vmax.f32 %v1657, %v1663
        %v1665 = vsel %vm1654, %v1651, -inf
        %v1666 = vmax.f32 %v1658, %v1665
        %v1667 = vmax.f32 %v1660, %v1662
        %v1668 = vmax.f32 %v1664, %v1666
        %v1669 = vmax.f32 %v1667, %v1668
        %v1670 = vrot.slane %v1669, 4
        %v1671 = vmax.f32 %v1669, %v1670
        %v1672 = vrot.slane %v1671, 2
        %v1673 = vmax.f32 %v1671, %v1672
        %v1674 = vrot.slane %v1673, 1
        %v1675 = vmax.f32 %v1673, %v1674
        %v1676 = vsub.f32 %v1624, %v1675
        %v1677 = vsub.f32 %v1627, %v1675
        %v1678 = vsub.f32 %v1632, %v1675
        %v1679 = vsub.f32 %v1635, %v1675
        %v1680 = vsub.f32 %v1640, %v1675
        %v1681 = vsub.f32 %v1643, %v1675
        %v1682 = vsub.f32 %v1648, %v1675
        %v1683 = vsub.f32 %v1651, %v1675
        %v1684 = vmul.f32 %v1676, 1.442695
        %v1685 = vpow.pop %v1684
        %v1686 = vmul.f32 %v1677, 1.442695
        %v1687 = vpow.pop %v1686
        %v1688 = vmul.f32 %v1678, 1.442695
        %v1689 = vpow.pop %v1688
        %v1690 = vmul.f32 %v1679, 1.442695
        %v1691 = vpow.pop %v1690
        %v1692 = vmul.f32 %v1680, 1.442695
        %v1693 = vpow.pop %v1692
        %v1694 = vmul.f32 %v1681, 1.442695
        %v1695 = vpow.pop %v1694
        %v1696 = vmul.f32 %v1682, 1.442695
        %v1697 = vpow.pop %v1696
        %v1698 = vmul.f32 %v1683, 1.442695
        %v1699 = vpow.pop %v1698
        %v1700 = vsel %vm1654, %v1685, 0.0
        %v1701 = vsel %vm1654, %v1687, 0.0
        %v1702 = vadd.f32 %v1700, %v1701
        %v1703 = vsel %vm1654, %v1689, 0.0
        %v1704 = vadd.f32 %v1702, %v1703
        %v1705 = vsel %vm1654, %v1691, 0.0
        %v1706 = vadd.f32 %v1704, %v1705
        %v1707 = vsel %vm1654, %v1693, 0.0
        %v1708 = vadd.f32 %v1706, %v1707
        %v1709 = vsel %vm1654, %v1695, 0.0
        %v1710 = vadd.f32 %v1708, %v1709
        %v1711 = vsel %vm1654, %v1697, 0.0
        %v1712 = vadd.f32 %v1710, %v1711
        %v1713 = vsel %vm1654, %v1699, 0.0
        %v1714 = vadd.f32 %v1712, %v1713
        %v1715 = vrot.slane %v1714, 4
        %v1716 = vadd.f32 %v1714, %v1715
        %v1717 = vrot.slane %v1716, 2
        %v1718 = vadd.f32 %v1716, %v1717
        %v1719 = vrot.slane %v1718, 1
        %v1720 = vadd.f32 %v1718, %v1719
        %v1721 = vrcp.pop %v1720
        %v1722 = vmul.f32 %v1685, %v1721
        %v1723 = vmul.f32 %v1687, %v1721
        %v1724 = vmul.f32 %v1689, %v1721
        %v1725 = vmul.f32 %v1691, %v1721
        %v1726 = vmul.f32 %v1693, %v1721
        %v1727 = vmul.f32 %v1695, %v1721
        %v1728 = vmul.f32 %v1697, %v1721
        %v1729 = vmul.f32 %v1699, %v1721
        %v1730 = vpack.c.bf16 %v1723, %v1722
        %v1731 = vpack.c.bf16 %v1725, %v1724
        %v1732 = vpack.c.bf16 %v1727, %v1726
        %v1733 = vpack.c.bf16 %v1729, %v1728
        %v1734 = vld [vmem:[%s11] sm:$0xf]
        %v1736 = vsel %vm1654, %v1730, 0
        %v1739 = vsel %vm1654, %v1731, 0
        %v1742 = vsel %vm1654, %v1732, 0
        %v1745 = vsel %vm1654, %v1733, 0
        %vm1747 = vcmask 1043456
        %v1749 = vsel %vm1747, %v1734, 0
        %1751 = vmatprep.subr.bf16.mxu0 0
        %1752 = vmatpush1.bf16.msra.mxu0 %v1749
        %1753 = vmatprep.subr.bf16.mxu0 0
        %1754 = vmatpush1.bf16.msra.mxu0 0
        %1755 = vmatprep.subr.bf16.mxu0 0
        %1756 = vmatpush1.bf16.msra.mxu0 0
        %1757 = vmatprep.subr.bf16.mxu0 0
        %1758 = vmatpush1.bf16.msra.mxu0 0
        %1759 = vmatprep.subr.bf16.mxu0 0
        %1760 = vmatpush1.bf16.msra.mxu0 0
        %1761 = vmatprep.subr.bf16.mxu0 0
        %1762 = vmatpush1.bf16.msra.mxu0 0
        %1763 = vmatprep.subr.bf16.mxu0 0
        %1764 = vmatpush1.bf16.msra.mxu0 0
        %1765 = vmatprep.subr.bf16.mxu0 0
        %1766 = vmatpush1.bf16.msra.mxu0 0
        %1767 = vmatprep.subr.bf16.mxu0 0
        %1768 = vmatpush1.bf16.msra.mxu0 0
        %1769 = vmatprep.subr.bf16.mxu0 0
        %1770 = vmatpush1.bf16.msra.mxu0 0
        %1771 = vmatprep.subr.bf16.mxu0 0
        %1772 = vmatpush1.bf16.msra.mxu0 0
        %1773 = vmatprep.subr.bf16.mxu0 0
        %1774 = vmatpush1.bf16.msra.mxu0 0
        %1775 = vmatprep.subr.bf16.mxu0 0
        %1776 = vmatpush1.bf16.msra.mxu0 0
        %1777 = vmatprep.subr.bf16.mxu0 0
        %1778 = vmatpush1.bf16.msra.mxu0 0
        %1779 = vmatprep.subr.bf16.mxu0 0
        %1780 = vmatpush1.bf16.msra.mxu0 0
        %1781 = vmatprep.subr.bf16.mxu0 0
        %1782 = vmatpush1.bf16.msra.mxu0 0
        %1783 = vmatprep.mubr.bf16.mxu0 0
        %1784 = vmatmul.mubr.bf16.gmra.mrb[0].mxu0 %v1736
        %v1785 = vpop.f32.mrb[0].mxu0
        %v1786 = vadd.f32 0.0, %v1785
        %v1787 = vpop.f32.mrb[0].mxu0
        %v1788 = vpop.f32.mrb[0].mxu0
        %v1789 = vadd.f32 0.0, %v1788
        %v1790 = vpop.f32.mrb[0].mxu0
        %1791 = vmatprep.mubr.bf16.mxu0 0
        %1792 = vmatmul.mubr.bf16.gmra.mrb[0].mxu0 %v1739
        %v1793 = vpop.f32.mrb[0].mxu0
        %v1794 = vadd.f32 0.0, %v1793
        %v1795 = vpop.f32.mrb[0].mxu0
        %v1796 = vpop.f32.mrb[0].mxu0
        %v1797 = vadd.f32 0.0, %v1796
        %v1798 = vpop.f32.mrb[0].mxu0
        %1799 = vmatprep.mubr.bf16.mxu0 0
        %1800 = vmatmul.mubr.bf16.gmra.mrb[0].mxu0 %v1742
        %v1801 = vpop.f32.mrb[0].mxu0
        %v1802 = vadd.f32 0.0, %v1801
        %v1803 = vpop.f32.mrb[0].mxu0
        %v1804 = vpop.f32.mrb[0].mxu0
        %v1805 = vadd.f32 0.0, %v1804
        %v1806 = vpop.f32.mrb[0].mxu0
        %1807 = vmatprep.mubr.bf16.mxu0 0
        %1808 = vmatmul.mubr.bf16.gmra.mrb[0].mxu0 %v1745
        %v1809 = vpop.f32.mrb[0].mxu0
        %v1810 = vadd.f32 0.0, %v1809
        %v1811 = vpop.f32.mrb[0].mxu0
        %v1812 = vpop.f32.mrb[0].mxu0
        %v1813 = vadd.f32 0.0, %v1812
        %v1814 = vpop.f32.mrb[0].mxu0
        %1815 = vdwg.mxu0
        %v1816 = vmul.f32 %v1786, %v776
        %v1817 = vmul.f32 %v1789, %v777
        %v1818 = vmul.f32 %v1794, %v778
        %v1819 = vmul.f32 %v1797, %v779
        %v1820 = vmul.f32 %v1802, %v780
        %v1821 = vmul.f32 %v1805, %v781
        %v1822 = vmul.f32 %v1810, %v782
        %v1823 = vmul.f32 %v1813, %v783
        %v1824 = vsel %vm784, %v1816, 0.0
        %v1825 = vsel %vm784, %v1817, 0.0
        %v1826 = vadd.f32 %v1824, %v1825
        %v1827 = vsel %vm784, %v1818, 0.0
        %v1828 = vadd.f32 %v1826, %v1827
        %v1829 = vsel %vm784, %v1819, 0.0
        %v1830 = vadd.f32 %v1828, %v1829
        %v1831 = vsel %vm784, %v1820, 0.0
        %v1832 = vadd.f32 %v1830, %v1831
        %v1833 = vsel %vm784, %v1821, 0.0
        %v1834 = vadd.f32 %v1832, %v1833
        %v1835 = vsel %vm784, %v1822, 0.0
        %v1836 = vadd.f32 %v1834, %v1835
        %v1837 = vsel %vm784, %v1823, 0.0
        %v1838 = vadd.f32 %v1836, %v1837
        %v1839 = vrot.slane %v1838, 4
        %v1840 = vadd.f32 %v1838, %v1839
        %v1841 = vrot.slane %v1840, 2
        %v1842 = vadd.f32 %v1840, %v1841
        %v1843 = vrot.slane %v1842, 1
        %v1844 = vadd.f32 %v1842, %v1843
        %v1845 = vpack.c.bf16 %v1844, %v1844
        %v1846 = vpack.c.bf16 %v1543, %v1543
        %v1847 = vld [vmem:[#allocation13] sm:$0xf]
        %v1848 = vld [vmem:[#allocation13 + $0x4] sm:$0xf]
        %v1849 = vld [vmem:[#allocation13 + $0x8] sm:$0xf]
        %v1850 = vld [vmem:[#allocation13 + $0xc] sm:$0xf]
        %s1851 = scalar_lea.vmem [#allocation13], 32
        %v1852 = vld [vmem:[%s1851] sm:$0xf]
        %v1853 = vld [vmem:[%s1851 + $0x4] sm:$0xf]
        %v1854 = vld [vmem:[%s1851 + $0x8] sm:$0xf]
        %v1855 = vld [vmem:[%s1851 + $0xc] sm:$0xf]
        %v1860 = vunpack.c.l.b16 %v1852
        %v1861 = vunpack.c.l.b16 %v1853
        %v1862 = vunpack.c.l.b16 %v1854
        %v1863 = vunpack.c.l.b16 %v1855
        %v1864 = vpack.c.b16 %v1861, %v1860
        %v1865 = vpack.c.b16 %v1863, %v1862
        %v1869 = vsel %vm784, %v1846, 0
        %1871 = vmatprep.subr.bf16.mxu0 0
        %1872 = vmatpush1.bf16.msra.mxu0 %v1864
        %1873 = vmatprep.subr.bf16.mxu0 0
        %1874 = vmatpush1.bf16.msra.mxu0 %v1865
        %1875 = vmatprep.subr.bf16.mxu0 0
        %1876 = vmatpush1.bf16.msra.mxu0 0
        %1877 = vmatprep.subr.bf16.mxu0 0
        %1878 = vmatpush1.bf16.msra.mxu0 0
        %1879 = vmatprep.subr.bf16.mxu0 0
        %1880 = vmatpush1.bf16.msra.mxu0 0
        %1881 = vmatprep.subr.bf16.mxu0 0
        %1882 = vmatpush1.bf16.msra.mxu0 0
        %1883 = vmatprep.subr.bf16.mxu0 0
        %1884 = vmatpush1.bf16.msra.mxu0 0
        %1885 = vmatprep.subr.bf16.mxu0 0
        %1886 = vmatpush1.bf16.msra.mxu0 0
        %1887 = vmatprep.subr.bf16.mxu0 0
        %1888 = vmatpush1.bf16.msra.mxu0 0
        %1889 = vmatprep.subr.bf16.mxu0 0
        %1890 = vmatpush1.bf16.msra.mxu0 0
        %1891 = vmatprep.subr.bf16.mxu0 0
        %1892 = vmatpush1.bf16.msra.mxu0 0
        %1893 = vmatprep.subr.bf16.mxu0 0
        %1894 = vmatpush1.bf16.msra.mxu0 0
        %1895 = vmatprep.subr.bf16.mxu0 0
        %1896 = vmatpush1.bf16.msra.mxu0 0
        %1897 = vmatprep.subr.bf16.mxu0 0
        %1898 = vmatpush1.bf16.msra.mxu0 0
        %1899 = vmatprep.subr.bf16.mxu0 0
        %1900 = vmatpush1.bf16.msra.mxu0 0
        %1901 = vmatprep.subr.bf16.mxu0 0
        %1902 = vmatpush1.bf16.msra.mxu0 0
        %1903 = vmatprep.mubr.bf16.mxu0 0
        %1904 = vmatmul.mubr.bf16.gmra.mrb[0].mxu0 %v1869
        %v1905 = vpop.f32.mrb[0].mxu0
        %v1906 = vadd.f32 0.0, %v1905
        %v1907 = vpop.f32.mrb[0].mxu0
        %v1908 = vpop.f32.mrb[0].mxu0
        %v1909 = vpop.f32.mrb[0].mxu0
        %1910 = vdwg.mxu0
        %v1915 = vunpack.c.l.b16 %v1847
        %v1916 = vunpack.c.l.b16 %v1848
        %v1917 = vunpack.c.l.b16 %v1849
        %v1918 = vunpack.c.l.b16 %v1850
        %v1919 = vpack.c.b16 %v1916, %v1915
        %v1920 = vpack.c.b16 %v1918, %v1917
        %v1924 = vsel %vm784, %v1845, 0
        %1926 = vmatprep.subr.bf16.mxu0 0
        %1927 = vmatpush1.bf16.msra.mxu0 %v1919
        %1928 = vmatprep.subr.bf16.mxu0 0
        %1929 = vmatpush1.bf16.msra.mxu0 %v1920
        %1930 = vmatprep.subr.bf16.mxu0 0
        %1931 = vmatpush1.bf16.msra.mxu0 0
        %1932 = vmatprep.subr.bf16.mxu0 0
        %1933 = vmatpush1.bf16.msra.mxu0 0
        %1934 = vmatprep.subr.bf16.mxu0 0
        %1935 = vmatpush1.bf16.msra.mxu0 0
        %1936 = vmatprep.subr.bf16.mxu0 0
        %1937 = vmatpush1.bf16.msra.mxu0 0
        %1938 = vmatprep.subr.bf16.mxu0 0
        %1939 = vmatpush1.bf16.msra.mxu0 0
        %1940 = vmatprep.subr.bf16.mxu0 0
        %1941 = vmatpush1.bf16.msra.mxu0 0
        %1942 = vmatprep.subr.bf16.mxu0 0
        %1943 = vmatpush1.bf16.msra.mxu0 0
        %1944 = vmatprep.subr.bf16.mxu0 0
        %1945 = vmatpush1.bf16.msra.mxu0 0
        %1946 = vmatprep.subr.bf16.mxu0 0
        %1947 = vmatpush1.bf16.msra.mxu0 0
        %1948 = vmatprep.subr.bf16.mxu0 0
        %1949 = vmatpush1.bf16.msra.mxu0 0
        %1950 = vmatprep.subr.bf16.mxu0 0
        %1951 = vmatpush1.bf16.msra.mxu0 0
        %1952 = vmatprep.subr.bf16.mxu0 0
        %1953 = vmatpush1.bf16.msra.mxu0 0
        %1954 = vmatprep.subr.bf16.mxu0 0
        %1955 = vmatpush1.bf16.msra.mxu0 0
        %1956 = vmatprep.subr.bf16.mxu0 0
        %1957 = vmatpush1.bf16.msra.mxu0 0
        %1958 = vmatprep.mubr.bf16.mxu0 0
        %1959 = vmatmul.mubr.bf16.gmra.mrb[0].mxu0 %v1924
        %v1960 = vpop.f32.mrb[0].mxu0
        %v1961 = vadd.f32 %v1906, %v1960
        %v1962 = vpop.f32.mrb[0].mxu0
        %v1963 = vpop.f32.mrb[0].mxu0
        %v1964 = vpop.f32.mrb[0].mxu0
        %1965 = vdwg.mxu0
        %v1966 = vld [vmem:[%s13] sm:$0x1]
        %v1967 = vadd.f32 %v1961, %v1966
        %s1968 = scalar_lea.vmem [#allocation13], 16
        %v1969 = vld [vmem:[%s1968] sm:$0xf]
        %v1970 = vld [vmem:[%s1968 + $0x4] sm:$0xf]
        %v1971 = vld [vmem:[%s1968 + $0x8] sm:$0xf]
        %v1972 = vld [vmem:[%s1968 + $0xc] sm:$0xf]
        %s1973 = scalar_lea.vmem [#allocation13], 48
        %v1974 = vld [vmem:[%s1973] sm:$0xf]
        %v1975 = vld [vmem:[%s1973 + $0x4] sm:$0xf]
        %v1976 = vld [vmem:[%s1973 + $0x8] sm:$0xf]
        %v1977 = vld [vmem:[%s1973 + $0xc] sm:$0xf]
        %v1982 = vunpack.c.l.b16 %v1974
        %v1983 = vunpack.c.l.b16 %v1975
        %v1984 = vunpack.c.l.b16 %v1976
        %v1985 = vunpack.c.l.b16 %v1977
        %v1986 = vpack.c.b16 %v1983, %v1982
        %v1987 = vpack.c.b16 %v1985, %v1984
        %1990 = vmatprep.subr.bf16.mxu0 0
        %1991 = vmatpush1.bf16.msra.mxu0 %v1986
        %1992 = vmatprep.subr.bf16.mxu0 0
        %1993 = vmatpush1.bf16.msra.mxu0 %v1987
        %1994 = vmatprep.subr.bf16.mxu0 0
        %1995 = vmatpush1.bf16.msra.mxu0 0
        %1996 = vmatprep.subr.bf16.mxu0 0
        %1997 = vmatpush1.bf16.msra.mxu0 0
        %1998 = vmatprep.subr.bf16.mxu0 0
        %1999 = vmatpush1.bf16.msra.mxu0 0
        %2000 = vmatprep.subr.bf16.mxu0 0
        %2001 = vmatpush1.bf16.msra.mxu0 0
        %2002 = vmatprep.subr.bf16.mxu0 0
        %2003 = vmatpush1.bf16.msra.mxu0 0
        %2004 = vmatprep.subr.bf16.mxu0 0
        %2005 = vmatpush1.bf16.msra.mxu0 0
        %2006 = vmatprep.subr.bf16.mxu0 0
        %2007 = vmatpush1.bf16.msra.mxu0 0
        %2008 = vmatprep.subr.bf16.mxu0 0
        %2009 = vmatpush1.bf16.msra.mxu0 0
        %2010 = vmatprep.subr.bf16.mxu0 0
        %2011 = vmatpush1.bf16.msra.mxu0 0
        %2012 = vmatprep.subr.bf16.mxu0 0
        %2013 = vmatpush1.bf16.msra.mxu0 0
        %2014 = vmatprep.subr.bf16.mxu0 0
        %2015 = vmatpush1.bf16.msra.mxu0 0
        %2016 = vmatprep.subr.bf16.mxu0 0
        %2017 = vmatpush1.bf16.msra.mxu0 0
        %2018 = vmatprep.subr.bf16.mxu0 0
        %2019 = vmatpush1.bf16.msra.mxu0 0
        %2020 = vmatprep.subr.bf16.mxu0 0
        %2021 = vmatpush1.bf16.msra.mxu0 0
        %2022 = vmatprep.mubr.bf16.mxu0 0
        %2023 = vmatmul.mubr.bf16.gmra.mrb[0].mxu0 %v1869
        %v2024 = vpop.f32.mrb[0].mxu0
        %v2025 = vadd.f32 0.0, %v2024
        %v2026 = vpop.f32.mrb[0].mxu0
        %v2027 = vpop.f32.mrb[0].mxu0
        %v2028 = vpop.f32.mrb[0].mxu0
        %2029 = vdwg.mxu0
        %v2034 = vunpack.c.l.b16 %v1969
        %v2035 = vunpack.c.l.b16 %v1970
        %v2036 = vunpack.c.l.b16 %v1971
        %v2037 = vunpack.c.l.b16 %v1972
        %v2038 = vpack.c.b16 %v2035, %v2034
        %v2039 = vpack.c.b16 %v2037, %v2036
        %2042 = vmatprep.subr.bf16.mxu0 0
        %2043 = vmatpush1.bf16.msra.mxu0 %v2038
        %2044 = vmatprep.subr.bf16.mxu0 0
        %2045 = vmatpush1.bf16.msra.mxu0 %v2039
        %2046 = vmatprep.subr.bf16.mxu0 0
        %2047 = vmatpush1.bf16.msra.mxu0 0
        %2048 = vmatprep.subr.bf16.mxu0 0
        %2049 = vmatpush1.bf16.msra.mxu0 0
        %2050 = vmatprep.subr.bf16.mxu0 0
        %2051 = vmatpush1.bf16.msra.mxu0 0
        %2052 = vmatprep.subr.bf16.mxu0 0
        %2053 = vmatpush1.bf16.msra.mxu0 0
        %2054 = vmatprep.subr.bf16.mxu0 0
        %2055 = vmatpush1.bf16.msra.mxu0 0
        %2056 = vmatprep.subr.bf16.mxu0 0
        %2057 = vmatpush1.bf16.msra.mxu0 0
        %2058 = vmatprep.subr.bf16.mxu0 0
        %2059 = vmatpush1.bf16.msra.mxu0 0
        %2060 = vmatprep.subr.bf16.mxu0 0
        %2061 = vmatpush1.bf16.msra.mxu0 0
        %2062 = vmatprep.subr.bf16.mxu0 0
        %2063 = vmatpush1.bf16.msra.mxu0 0
        %2064 = vmatprep.subr.bf16.mxu0 0
        %2065 = vmatpush1.bf16.msra.mxu0 0
        %2066 = vmatprep.subr.bf16.mxu0 0
        %2067 = vmatpush1.bf16.msra.mxu0 0
        %2068 = vmatprep.subr.bf16.mxu0 0
        %2069 = vmatpush1.bf16.msra.mxu0 0
        %2070 = vmatprep.subr.bf16.mxu0 0
        %2071 = vmatpush1.bf16.msra.mxu0 0
        %2072 = vmatprep.subr.bf16.mxu0 0
        %2073 = vmatpush1.bf16.msra.mxu0 0
        %2074 = vmatprep.mubr.bf16.mxu0 0
        %2075 = vmatmul.mubr.bf16.gmra.mrb[0].mxu0 %v1924
        %v2076 = vpop.f32.mrb[0].mxu0
        %v2077 = vadd.f32 %v2025, %v2076
        %v2078 = vpop.f32.mrb[0].mxu0
        %v2079 = vpop.f32.mrb[0].mxu0
        %v2080 = vpop.f32.mrb[0].mxu0
        %2081 = vdwg.mxu0
        %s2082 = scalar_lea.vmem %s13, 1
        %v2083 = vld [vmem:[%s2082] sm:$0x1]
        %v2084 = vadd.f32 %v2077, %v2083
        %v2085 = vxor.u32 %v2084, 2147483648
        %v2086 = vmul.f32 %v2085, 1.442695
        %v2087 = vpow.pop %v2086
        %v2088 = vadd.f32 %v2087, 1.0
        %v2089 = vrcp.pop %v2088
        %v2090 = vmul.f32 1.0, %v2089
        %v2091 = vmul.f32 %v1967, %v2090
        %2092 = vst.msk [vmem:[%s744] sm:$0x1] %vm1544, %v2091
        %v2093 = vpack.c.bf16 %v2091, %v2091
        %v2094 = vld [vmem:[%s14] sm:$0xf]
        %v2095 = vld [vmem:[%s14 + $0x4] sm:$0xf]
        %v2096 = vld [vmem:[%s14 + $0x8] sm:$0xf]
        %v2097 = vld [vmem:[%s14 + $0xc] sm:$0xf]
        %v2098 = vld [vmem:[%s15] sm:$0x1]
        %v2103 = vunpack.c.l.b16 %v2094
        %v2104 = vunpack.c.l.b16 %v2095
        %v2105 = vunpack.c.l.b16 %v2096
        %v2106 = vunpack.c.l.b16 %v2097
        %v2107 = vpack.c.b16 %v2104, %v2103
        %v2108 = vpack.c.b16 %v2106, %v2105
        %v2112 = vsel %vm784, %v2093, 0
        %2114 = vmatprep.subr.bf16.mxu0 0
        %2115 = vmatpush1.bf16.msra.mxu0 %v2107
        %2116 = vmatprep.subr.bf16.mxu0 0
        %2117 = vmatpush1.bf16.msra.mxu0 %v2108
        %2118 = vmatprep.subr.bf16.mxu0 0
        %2119 = vmatpush1.bf16.msra.mxu0 0
        %2120 = vmatprep.subr.bf16.mxu0 0
        %2121 = vmatpush1.bf16.msra.mxu0 0
        %2122 = vmatprep.subr.bf16.mxu0 0
        %2123 = vmatpush1.bf16.msra.mxu0 0
        %2124 = vmatprep.subr.bf16.mxu0 0
        %2125 = vmatpush1.bf16.msra.mxu0 0
        %2126 = vmatprep.subr.bf16.mxu0 0
        %2127 = vmatpush1.bf16.msra.mxu0 0
        %2128 = vmatprep.subr.bf16.mxu0 0
        %2129 = vmatpush1.bf16.msra.mxu0 0
        %2130 = vmatprep.subr.bf16.mxu0 0
        %2131 = vmatpush1.bf16.msra.mxu0 0
        %2132 = vmatprep.subr.bf16.mxu0 0
        %2133 = vmatpush1.bf16.msra.mxu0 0
        %2134 = vmatprep.subr.bf16.mxu0 0
        %2135 = vmatpush1.bf16.msra.mxu0 0
        %2136 = vmatprep.subr.bf16.mxu0 0
        %2137 = vmatpush1.bf16.msra.mxu0 0
        %2138 = vmatprep.subr.bf16.mxu0 0
        %2139 = vmatpush1.bf16.msra.mxu0 0
        %2140 = vmatprep.subr.bf16.mxu0 0
        %2141 = vmatpush1.bf16.msra.mxu0 0
        %2142 = vmatprep.subr.bf16.mxu0 0
        %2143 = vmatpush1.bf16.msra.mxu0 0
        %2144 = vmatprep.subr.bf16.mxu0 0
        %2145 = vmatpush1.bf16.msra.mxu0 0
        %2146 = vmatprep.mubr.bf16.mxu0 0
        %2147 = vmatmul.mubr.bf16.gmra.mrb[0].mxu0 %v2112
        %v2148 = vpop.f32.mrb[0].mxu0
        %v2149 = vadd.f32 %v2098, %v2148
        %v2150 = vpop.f32.mrb[0].mxu0
        %v2151 = vpop.f32.mrb[0].mxu0
        %v2152 = vpop.f32.mrb[0].mxu0
        %2153 = vdwg.mxu0
        %2154 = vst [vmem:[%s738] sm:$0x1] %v2149
        %s2155 = sand.u32 %s404, 1
        %s2156 = scalar_lea.sflag [#allocation6], %s2155
        %s2157 = sand.u32 %s404, 1
        %s2158 = scalar_lea.vmem [#allocation15], %s2157
        %s2159 = sand.u32 %s54, 1
        %s2160 = scalar_lea.sflag [#allocation17], %s2159
        %s2161 = sand.u32 %s430, 1
        %s2162 = scalar_lea.vmem [#allocation16], %s2161
        %s2163 = sand.u32 %s54, 1
        %s2164 = scalar_lea.sflag [#allocation17], %s2163
        %s2165 = sand.u32 %s456, 1
        %s2166 = scalar_lea.vmem [#allocation18], %s2165
        %s2167 = sand.u32 %s482, 1
        %s2168 = scalar_lea.sflag [#allocation20], %s2167
        %s2169 = sand.u32 %s482, 1
        %s2170 = scalar_lea.vmem [#allocation19], %s2169
        // Predicated region
        $region105: #{tpu_custom_call.1} parent=79 // pred_check
          %p2171 = pneg %p414
        $region106: #{tpu_custom_call.1} parent=79 // pred_check_branch
          %2173 = sbr.rel (%p2171) target = $region108
        $region107: #{tpu_custom_call.1} parent=79 // pred_region
          %s2175 = ssub.s32 16, 16
          %2176 = vsyncadd %s2156, %s2175
          %s2177 = smul.addr %s54, 16
          %s2178 = scalar_lea.hbm %s16, %s2177
          %s2180 = sshll.u32 %s2158, 4
          %s2181 = int_to_ptr.vmem [resolvable:$true] %s2180
          %2183 = dma.vmem_to_hbm [thread:$0]  %s2181, 16, %s2178, %s2156
        $region108: #{tpu_custom_call.1} parent=79 // pred_fallthru
          _
        // Predicated region
        $region109: #{tpu_custom_call.1} parent=79 // pred_check
          %p2184 = pneg %p440
        $region110: #{tpu_custom_call.1} parent=79 // pred_check_branch
          %2186 = sbr.rel (%p2184) target = $region112
        $region111: #{tpu_custom_call.1} parent=79 // pred_region
          %s2188 = ssub.s32 16, 16
          %2189 = vsyncadd %s2160, %s2188
          %s2190 = smul.addr %s54, 16
          %s2191 = scalar_lea.hbm %s17, %s2190
          %s2193 = sshll.u32 %s2162, 4
          %s2194 = int_to_ptr.vmem [resolvable:$true] %s2193
          %2196 = dma.vmem_to_hbm [thread:$0]  %s2194, 16, %s2191, %s2160
        $region112: #{tpu_custom_call.1} parent=79 // pred_fallthru
          _
        // Predicated region
        $region113: #{tpu_custom_call.1} parent=79 // pred_check
          %p2197 = pneg %p466
        $region114: #{tpu_custom_call.1} parent=79 // pred_check_branch
          %2199 = sbr.rel (%p2197) target = $region116
        $region115: #{tpu_custom_call.1} parent=79 // pred_region
          %s2201 = ssub.s32 16, 16
          %2202 = vsyncadd %s2164, %s2201
          %s2203 = smul.addr %s54, 16
          %s2204 = scalar_lea.hbm %s18, %s2203
          %s2206 = sshll.u32 %s2166, 4
          %s2207 = int_to_ptr.vmem [resolvable:$true] %s2206
          %2209 = dma.vmem_to_hbm [thread:$0]  %s2207, 16, %s2204, %s2164
        $region116: #{tpu_custom_call.1} parent=79 // pred_fallthru
          _
        // Predicated region
        $region117: #{tpu_custom_call.1} parent=79 // pred_check
          %p2210 = pneg %p492
        $region118: #{tpu_custom_call.1} parent=79 // pred_check_branch
          %2212 = sbr.rel (%p2210) target = $region120
        $region119: #{tpu_custom_call.1} parent=79 // pred_region
          %s2214 = ssub.s32 16, 16
          %2215 = vsyncadd %s2168, %s2214
          %s2216 = smul.addr %s54, 16
          %s2217 = scalar_lea.hbm %s19, %s2216
          %s2219 = sshll.u32 %s2170, 4
          %s2220 = int_to_ptr.vmem [resolvable:$true] %s2219
          %2222 = dma.vmem_to_hbm [thread:$0]  %s2220, 16, %s2217, %s2168
        $region120: #{tpu_custom_call.1} parent=79 // pred_fallthru
          _
      $region80: #{tpu_custom_call.1} parent=5 // pred_fallthru
        _
      %p2223 = scmp.le.s32.totalorder 2, %s49
      // Predicated region
      $region121: #{tpu_custom_call.1} parent=5 // pred_check
        %p2224 = pneg %p2223
      $region122: #{tpu_custom_call.1} parent=5 // pred_check_branch
        %2226 = sbr.rel (%p2224) target = $region124
      $region123: #{tpu_custom_call.1} parent=5 // pred_region
        %s2227 = ssub.s32 %s49, 2
        // Predicated region
        $region125: #{tpu_custom_call.1} parent=123 // pred_check
          %p2228 = pneg %p420
        $region126: #{tpu_custom_call.1} parent=123 // pred_check_branch
          %2230 = sbr.rel (%p2228) target = $region128
        $region127: #{tpu_custom_call.1} parent=123 // pred_region
          %s2231 = sand.u32 %s405, 1
          %s2232 = scalar_lea.sflag [#allocation6], %s2231
          %s2233 = sand.u32 %s405, 1
          %s2234 = scalar_lea.vmem [#allocation15], %s2233
          %2235 = dma.done %s2232, 16
        $region128: #{tpu_custom_call.1} parent=123 // pred_fallthru
          _
        // Predicated region
        $region129: #{tpu_custom_call.1} parent=123 // pred_check
          %p2236 = pneg %p446
        $region130: #{tpu_custom_call.1} parent=123 // pred_check_branch
          %2238 = sbr.rel (%p2236) target = $region132
        $region131: #{tpu_custom_call.1} parent=123 // pred_region
          %s2239 = sand.u32 %s55, 1
          %s2240 = scalar_lea.sflag [#allocation17], %s2239
          %s2241 = sand.u32 %s431, 1
          %s2242 = scalar_lea.vmem [#allocation16], %s2241
          %2243 = dma.done %s2240, 16
        $region132: #{tpu_custom_call.1} parent=123 // pred_fallthru
          _
        // Predicated region
        $region133: #{tpu_custom_call.1} parent=123 // pred_check
          %p2244 = pneg %p472
        $region134: #{tpu_custom_call.1} parent=123 // pred_check_branch
          %2246 = sbr.rel (%p2244) target = $region136
        $region135: #{tpu_custom_call.1} parent=123 // pred_region
          %s2247 = sand.u32 %s55, 1
          %s2248 = scalar_lea.sflag [#allocation17], %s2247
          %s2249 = sand.u32 %s457, 1
          %s2250 = scalar_lea.vmem [#allocation18], %s2249
          %2251 = dma.done %s2248, 16
        $region136: #{tpu_custom_call.1} parent=123 // pred_fallthru
          _
        // Predicated region
        $region137: #{tpu_custom_call.1} parent=123 // pred_check
          %p2252 = pneg %p498
        $region138: #{tpu_custom_call.1} parent=123 // pred_check_branch
          %2254 = sbr.rel (%p2252) target = $region140
        $region139: #{tpu_custom_call.1} parent=123 // pred_region
          %s2255 = sand.u32 %s483, 1
          %s2256 = scalar_lea.sflag [#allocation20], %s2255
          %s2257 = sand.u32 %s483, 1
          %s2258 = scalar_lea.vmem [#allocation19], %s2257
          %2259 = dma.done %s2256, 16
        $region140: #{tpu_custom_call.1} parent=123 // pred_fallthru
          _
      $region124: #{tpu_custom_call.1} parent=5 // pred_fallthru
        _
    $region6: #{tpu_custom_call.1} parent=1 // loop_footer
      %s53 = sadd.s32 1, %s49
    $region7: #{tpu_custom_call.1} parent=1 // loop_footer_branch
      %48 = sbr.rel target = $region3
    $region8: #{tpu_custom_call.1} parent=1 // loop_exit
      _
    %2260 = vsyncpa [#allocation5], 1
    %s2261 = scalar_lea.sflag [#allocation5], 1
    %2262 = vsyncpa %s2261, 1
    %2263 = vsyncpa [#allocation8], 1
    %s2264 = scalar_lea.sflag [#allocation8], 1
    %2265 = vsyncpa %s2264, 1
    %2266 = vsyncpa [#allocation11], 1
    %2267 = vsyncpa [#allocation14], 1
    %2268 = vsyncpa [#allocation6], 1
    %s2269 = scalar_lea.sflag [#allocation6], 1
    %2270 = vsyncpa %s2269, 1
    %2271 = vsyncpa [#allocation17], 1
    %s2272 = scalar_lea.sflag [#allocation17], 1
    %2273 = vsyncpa %s2272, 1
    %2274 = vsyncpa [#allocation20], 1
    %s2275 = scalar_lea.sflag [#allocation20], 1
    %2276 = vsyncpa %s2275, 1

</llo_original>
